<compile_context>
chip_gen: v7x
topology: tpu7x:2x2x1
jax: 0.10.0
libtpu: 0.0.40
codegen_flags: <defaults>
</compile_context>

<pallas_src>
import functools

import jax
import jax.numpy as jnp
from jax.experimental import pallas as pl
from jax.experimental.pallas import tpu as pltpu


_LANES = 128                     # lane-dense last dim (one full vreg lane width)
_BLOCK_ROWS = 4096               # rows per grid step; 4096x128 f32 = 2 MiB/buffer
_PAD_GRANULE = _LANES * 8        # ragged inputs pad to this (keeps rows % 8 == 0)
_PALLAS_MIN_ELEMS = 128 * 1024   # below this a fused XLA op wins on launch overhead


def _scale_shift_kernel(w_ref, b_ref, x_ref, o_ref):
    # w_ref, b_ref: (1, 1) f32 scalars in SMEM.
    # x_ref, o_ref: (_BLOCK_ROWS, _LANES) tiles in VMEM (last block may be partial).
    w = w_ref[0, 0]
    b = b_ref[0, 0]
    x = x_ref[...].astype(jnp.float32)
    o_ref[...] = (x * w + b).astype(o_ref.dtype)


@functools.partial(jax.jit, static_argnames=("force_pallas",))
def linear_1x1(x, w, b, force_pallas=False):
    """y = x * w + b, equivalent to torch.nn.Linear(1, 1).

    x: (..., 1) array (any float dtype)
    w: (1, 1) weight, b: (1,) bias
    """
    orig_shape = x.shape
    dtype = x.dtype
    w_s = jnp.asarray(w, dtype=jnp.float32).reshape(1, 1)
    b_s = jnp.asarray(b, dtype=jnp.float32).reshape(1, 1)

    n_elems = x.size
    lane_aligned = (n_elems % _LANES) == 0

    use_pallas = force_pallas or (lane_aligned and n_elems >= _PALLAS_MIN_ELEMS)
    if not use_pallas:
        # Small or ragged batch: a fused XLA elementwise op is already at the
        # HBM roofline with no launch / pad overhead.
        return (x.astype(jnp.float32) * w_s[0, 0] + b_s[0, 0]).astype(dtype)

    xf = x.reshape(-1)
    if lane_aligned:
        # Zero-copy fast path: both reshapes are metadata-only.
        rows = n_elems // _LANES
    else:
        # Ragged: pad only to the next multiple of 1024 elements (<=1023 junk
        # elements), not to a whole block.
        padded = pl.cdiv(n_elems, _PAD_GRANULE) * _PAD_GRANULE
        xf = jnp.pad(xf, (0, padded - n_elems))
        rows = padded // _LANES
    x2 = xf.reshape(rows, _LANES)

    out = pl.pallas_call(
        _scale_shift_kernel,
        out_shape=jax.ShapeDtypeStruct((rows, _LANES), dtype),
        grid_spec=pl.GridSpec(
            grid=(pl.cdiv(rows, _BLOCK_ROWS),),   # partial last block handled by Pallas
            in_specs=[
                pl.BlockSpec(memory_space=pltpu.SMEM),             # weight scalar
                pl.BlockSpec(memory_space=pltpu.SMEM),             # bias scalar
                pl.BlockSpec((_BLOCK_ROWS, _LANES), lambda i: (i, 0)),
            ],
            out_specs=pl.BlockSpec((_BLOCK_ROWS, _LANES), lambda i: (i, 0)),
        ),
        compiler_params=pltpu.CompilerParams(
            dimension_semantics=("parallel",),
        ),
    )(w_s, b_s, x2)

    y = out.reshape(-1)
    if not lane_aligned:
        y = y[:n_elems]
    return y.reshape(orig_shape)


if __name__ == "__main__":
    # Deterministic parameters (synthetic stand-in for the checkpoint).
    weight = jnp.array([[0.5]], dtype=jnp.float32)   # nn.Linear(1,1).weight
    bias = jnp.array([-0.25], dtype=jnp.float32)     # nn.Linear(1,1).bias

    key = jax.random.PRNGKey(0)
    k1, k2, k3 = jax.random.split(key, 3)

    # 1) Small batch matching the module's (N, in_features=1) convention:
    #    exercises the ragged pad path + a single partial block.
    x_small = jax.random.normal(k1, (8, 1), dtype=jnp.float32)
    y_small = jax.block_until_ready(
        linear_1x1(x_small, weight, bias, force_pallas=True))
    ref_small = x_small @ weight.T + bias
    assert jnp.allclose(y_small, ref_small, atol=1e-6), "small-batch mismatch"

    # 2) Lane-aligned batch: zero-copy fast path (no pad, no output slice).
    x_aligned = jax.random.normal(k2, (131072, 1), dtype=jnp.float32)
    y_aligned = jax.block_until_ready(linear_1x1(x_aligned, weight, bias))
    ref_aligned = x_aligned @ weight.T + bias
    assert jnp.allclose(y_aligned, ref_aligned, atol=1e-6), "aligned-batch mismatch"

    # 3) Ragged larger batch: pad-to-1024 path, multiple grid steps with a
    #    partial last block.
    x_ragged = jax.random.normal(k3, (600_000, 1), dtype=jnp.float32)
    y_ragged = jax.block_until_ready(
        linear_1x1(x_ragged, weight, bias, force_pallas=True))
    ref_ragged = x_ragged @ weight.T + bias
    assert jnp.allclose(y_ragged, ref_ragged, atol=1e-6), "ragged-batch mismatch"

    print("KERNEL_OK")
</pallas_src>

<mosaic_0001>
module attributes {stable_mosaic.version = 11 : i64} {
  func.func @_scale_shift_kernel(%arg0: i32, %arg1: memref<1x1xf32, #tpu.memory_space<smem>>, %arg2: memref<1x1xf32, #tpu.memory_space<smem>>, %arg3: memref<4096x128xf32, #tpu.memory_space<vmem>>, %arg4: memref<4096x128xf32, #tpu.memory_space<vmem>>) attributes {dimension_semantics = [#tpu.dimension_semantics<parallel>], iteration_bounds = array<i64: 1>, scalar_prefetch = 0 : i64, scratch_operands = 0 : i64, tpu.core_type = #tpu.core_type<tc>, window_params = [{transform_indices = @transform_0, window_bounds = array<i64: 1, 1>}, {transform_indices = @transform_1, window_bounds = array<i64: 1, 1>}, {transform_indices = @transform_2, window_bounds = array<i64: 4096, 128>}, {transform_indices = @transform_3, window_bounds = array<i64: 4096, 128>}]} {
    %c0 = arith.constant 0 : index
    %c0_0 = arith.constant 0 : index
    %0 = memref.load %arg1[%c0, %c0_0] : memref<1x1xf32, #tpu.memory_space<smem>>
    %c0_1 = arith.constant 0 : index
    %c0_2 = arith.constant 0 : index
    %1 = memref.load %arg2[%c0_1, %c0_2] : memref<1x1xf32, #tpu.memory_space<smem>>
    %c0_3 = arith.constant 0 : index
    %c0_4 = arith.constant 0 : index
    %2 = vector.load %arg3[%c0_3, %c0_4] : memref<4096x128xf32, #tpu.memory_space<vmem>>, vector<4096x128xf32>
    %3 = vector.broadcast %0 : f32 to vector<4096x128xf32>
    %4 = arith.mulf %2, %3 : vector<4096x128xf32>
    %5 = vector.broadcast %1 : f32 to vector<4096x128xf32>
    %6 = arith.addf %4, %5 : vector<4096x128xf32>
    %c0_5 = arith.constant 0 : index
    %c0_6 = arith.constant 0 : index
    %7 = vector.load %arg4[%c0_5, %c0_6] : memref<4096x128xf32, #tpu.memory_space<vmem>>, vector<4096x128xf32>
    tpu.vector_store %arg4[%c0_5, %c0_6], %6 {strides = array<i32>} : memref<4096x128xf32, #tpu.memory_space<vmem>>, vector<4096x128xf32>,
    return
  }
  func.func @transform_0(%arg0: i32) -> (i32, i32) {
    %c0_i32 = arith.constant 0 : i32
    %c0_i32_0 = arith.constant 0 : i32
    %c0_i32_1 = arith.constant 0 : i32
    return %c0_i32, %c0_i32_0 : i32, i32
  }
  func.func @transform_1(%arg0: i32) -> (i32, i32) {
    %c0_i32 = arith.constant 0 : i32
    %c0_i32_0 = arith.constant 0 : i32
    %c0_i32_1 = arith.constant 0 : i32
    return %c0_i32, %c0_i32_0 : i32, i32
  }
  func.func @transform_2(%arg0: i32) -> (i32, i32) {
    %c0_i32 = arith.constant 0 : i32
    %c0_i32_0 = arith.constant 0 : i32
    return %arg0, %c0_i32 : i32, i32
  }
  func.func @transform_3(%arg0: i32) -> (i32, i32) {
    %c0_i32 = arith.constant 0 : i32
    %c0_i32_0 = arith.constant 0 : i32
    return %arg0, %c0_i32 : i32, i32
  }
}

</mosaic_0001>

<llo_original>
// kernel: linear_1x1.1
$region0: #{linear_1x1.1}
  #allocation0 [shape = 'u32[]', space=smem, size = 0x4, offset = 0x4, fixed_abs, tag = 'smem constant byte address 0x4 - core index']
  #allocation1 [shape = 'u32[144,128]{1,0:T(1,128)}', space=vmem, size = 0x12000, scoped, tag = 'internal scratch']
  #allocation2 [shape = 'f32[1,1]{1,0:T(1,128)S(6)}', space=smem, size = 0x200, scoped, tag = 'scoped memory for linear_1x1.1']
  #allocation3 [shape = 'f32[1,1]{1,0:T(1,128)S(6)}', space=smem, size = 0x200, scoped, tag = 'scoped memory for linear_1x1.1']
  %s0 = inlined_call_operand.<no memory space> [shape: f32[1,1], index: 0, kind: input, shape index: {}]
  %s1 = inlined_call_operand.<no memory space> [shape: f32[1,1], index: 1, kind: input, shape index: {}]
  %s2 = inlined_call_operand.vmem [shape: f32[8,128], index: 2, kind: input, shape index: {}]
  %s3 = inlined_call_operand.vmem [shape: f32[8,128], index: 3, kind: output, shape index: {}]
  %s4 = sld [smem:[#allocation0]]
  $region56: #{linear_1x1.1} parent=0
    _
  %s6 = ssub.s32 1, %s4
  %s7 = scalar_select 0, %s6, %s4
  %8 = sst [smem:[#allocation2]] %s0
  %9 = sst [smem:[#allocation3]] %s1
  $region1: #{linear_1x1.1} parent=0
    #allocation4 [shape = 'u8[2097152]{0}', space=vmem, size = 0x200000, scoped, tag = 'output window, operand 0, single buffered']
    // Predicated region
    $region2: #{linear_1x1.1} parent=1 // pred_check
      _
    $region3: #{linear_1x1.1} parent=1 // pred_check_branch
      %11 = sbr.rel (0) target = $region5
    $region4: #{linear_1x1.1} parent=1 // pred_region
      _
    $region5: #{linear_1x1.1} parent=1 // pred_fallthru
      _
    // Predicated region
    $region6: #{linear_1x1.1} parent=1 // pred_check
      _
    $region7: #{linear_1x1.1} parent=1 // pred_check_branch
      %13 = sbr.rel (0) target = $region9
    $region8: #{linear_1x1.1} parent=1 // pred_region
      _
    $region9: #{linear_1x1.1} parent=1 // pred_fallthru
      _
    // Predicated region
    $region10: #{linear_1x1.1} parent=1 // pred_check
      _
    $region11: #{linear_1x1.1} parent=1 // pred_check_branch
      %15 = sbr.rel (0) target = $region13
    $region12: #{linear_1x1.1} parent=1 // pred_region
      _
    $region13: #{linear_1x1.1} parent=1 // pred_fallthru
      _
    %s16 = sld [smem:[#allocation2]]
    %s17 = sld [smem:[#allocation3]]
    %v18 = vld [vmem:[%s2] sm:$0xff]
    %v19 = vld [vmem:[%s2 + $0x8] sm:$0xff]
    %v20 = vld [vmem:[%s2 + $0x10] sm:$0xff]
    %v21 = vld [vmem:[%s2 + $0x18] sm:$0xff]
    %v22 = vld [vmem:[%s2 + $0x20] sm:$0xff]
    %v23 = vld [vmem:[%s2 + $0x28] sm:$0xff]
    %v24 = vld [vmem:[%s2 + $0x30] sm:$0xff]
    %v25 = vld [vmem:[%s2 + $0x38] sm:$0xff]
    %v26 = vld [vmem:[%s2 + $0x40] sm:$0xff]
    %v27 = vld [vmem:[%s2 + $0x48] sm:$0xff]
    %v28 = vld [vmem:[%s2 + $0x50] sm:$0xff]
    %v29 = vld [vmem:[%s2 + $0x58] sm:$0xff]
    %v30 = vld [vmem:[%s2 + $0x60] sm:$0xff]
    %v31 = vld [vmem:[%s2 + $0x68] sm:$0xff]
    %v32 = vld [vmem:[%s2 + $0x70] sm:$0xff]
    %v33 = vld [vmem:[%s2 + $0x78] sm:$0xff]
    %v34 = vld [vmem:[%s2 + $0x80] sm:$0xff]
    %v35 = vld [vmem:[%s2 + $0x88] sm:$0xff]
    %v36 = vld [vmem:[%s2 + $0x90] sm:$0xff]
    %v37 = vld [vmem:[%s2 + $0x98] sm:$0xff]
    %v38 = vld [vmem:[%s2 + $0xa0] sm:$0xff]
    %v39 = vld [vmem:[%s2 + $0xa8] sm:$0xff]
    %v40 = vld [vmem:[%s2 + $0xb0] sm:$0xff]
    %v41 = vld [vmem:[%s2 + $0xb8] sm:$0xff]
    %v42 = vld [vmem:[%s2 + $0xc0] sm:$0xff]
    %v43 = vld [vmem:[%s2 + $0xc8] sm:$0xff]
    %v44 = vld [vmem:[%s2 + $0xd0] sm:$0xff]
    %v45 = vld [vmem:[%s2 + $0xd8] sm:$0xff]
    %v46 = vld [vmem:[%s2 + $0xe0] sm:$0xff]
    %v47 = vld [vmem:[%s2 + $0xe8] sm:$0xff]
    %v48 = vld [vmem:[%s2 + $0xf0] sm:$0xff]
    %v49 = vld [vmem:[%s2 + $0xf8] sm:$0xff]
    %v50 = vld [vmem:[%s2 + $0x100] sm:$0xff]
    %v51 = vld [vmem:[%s2 + $0x108] sm:$0xff]
    %v52 = vld [vmem:[%s2 + $0x110] sm:$0xff]
    %v53 = vld [vmem:[%s2 + $0x118] sm:$0xff]
    %v54 = vld [vmem:[%s2 + $0x120] sm:$0xff]
    %v55 = vld [vmem:[%s2 + $0x128] sm:$0xff]
    %v56 = vld [vmem:[%s2 + $0x130] sm:$0xff]
    %v57 = vld [vmem:[%s2 + $0x138] sm:$0xff]
    %v58 = vld [vmem:[%s2 + $0x140] sm:$0xff]
    %v59 = vld [vmem:[%s2 + $0x148] sm:$0xff]
    %v60 = vld [vmem:[%s2 + $0x150] sm:$0xff]
    %v61 = vld [vmem:[%s2 + $0x158] sm:$0xff]
    %v62 = vld [vmem:[%s2 + $0x160] sm:$0xff]
    %v63 = vld [vmem:[%s2 + $0x168] sm:$0xff]
    %v64 = vld [vmem:[%s2 + $0x170] sm:$0xff]
    %v65 = vld [vmem:[%s2 + $0x178] sm:$0xff]
    %v66 = vld [vmem:[%s2 + $0x180] sm:$0xff]
    %v67 = vld [vmem:[%s2 + $0x188] sm:$0xff]
    %v68 = vld [vmem:[%s2 + $0x190] sm:$0xff]
    %v69 = vld [vmem:[%s2 + $0x198] sm:$0xff]
    %v70 = vld [vmem:[%s2 + $0x1a0] sm:$0xff]
    %v71 = vld [vmem:[%s2 + $0x1a8] sm:$0xff]
    %v72 = vld [vmem:[%s2 + $0x1b0] sm:$0xff]
    %v73 = vld [vmem:[%s2 + $0x1b8] sm:$0xff]
    %v74 = vld [vmem:[%s2 + $0x1c0] sm:$0xff]
    %v75 = vld [vmem:[%s2 + $0x1c8] sm:$0xff]
    %v76 = vld [vmem:[%s2 + $0x1d0] sm:$0xff]
    %v77 = vld [vmem:[%s2 + $0x1d8] sm:$0xff]
    %v78 = vld [vmem:[%s2 + $0x1e0] sm:$0xff]
    %v79 = vld [vmem:[%s2 + $0x1e8] sm:$0xff]
    %v80 = vld [vmem:[%s2 + $0x1f0] sm:$0xff]
    %v81 = vld [vmem:[%s2 + $0x1f8] sm:$0xff]
    %v82 = vld [vmem:[%s2 + $0x200] sm:$0xff]
    %v83 = vld [vmem:[%s2 + $0x208] sm:$0xff]
    %v84 = vld [vmem:[%s2 + $0x210] sm:$0xff]
    %v85 = vld [vmem:[%s2 + $0x218] sm:$0xff]
    %v86 = vld [vmem:[%s2 + $0x220] sm:$0xff]
    %v87 = vld [vmem:[%s2 + $0x228] sm:$0xff]
    %v88 = vld [vmem:[%s2 + $0x230] sm:$0xff]
    %v89 = vld [vmem:[%s2 + $0x238] sm:$0xff]
    %v90 = vld [vmem:[%s2 + $0x240] sm:$0xff]
    %v91 = vld [vmem:[%s2 + $0x248] sm:$0xff]
    %v92 = vld [vmem:[%s2 + $0x250] sm:$0xff]
    %v93 = vld [vmem:[%s2 + $0x258] sm:$0xff]
    %v94 = vld [vmem:[%s2 + $0x260] sm:$0xff]
    %v95 = vld [vmem:[%s2 + $0x268] sm:$0xff]
    %v96 = vld [vmem:[%s2 + $0x270] sm:$0xff]
    %v97 = vld [vmem:[%s2 + $0x278] sm:$0xff]
    %v98 = vld [vmem:[%s2 + $0x280] sm:$0xff]
    %v99 = vld [vmem:[%s2 + $0x288] sm:$0xff]
    %v100 = vld [vmem:[%s2 + $0x290] sm:$0xff]
    %v101 = vld [vmem:[%s2 + $0x298] sm:$0xff]
    %v102 = vld [vmem:[%s2 + $0x2a0] sm:$0xff]
    %v103 = vld [vmem:[%s2 + $0x2a8] sm:$0xff]
    %v104 = vld [vmem:[%s2 + $0x2b0] sm:$0xff]
    %v105 = vld [vmem:[%s2 + $0x2b8] sm:$0xff]
    %v106 = vld [vmem:[%s2 + $0x2c0] sm:$0xff]
    %v107 = vld [vmem:[%s2 + $0x2c8] sm:$0xff]
    %v108 = vld [vmem:[%s2 + $0x2d0] sm:$0xff]
    %v109 = vld [vmem:[%s2 + $0x2d8] sm:$0xff]
    %v110 = vld [vmem:[%s2 + $0x2e0] sm:$0xff]
    %v111 = vld [vmem:[%s2 + $0x2e8] sm:$0xff]
    %v112 = vld [vmem:[%s2 + $0x2f0] sm:$0xff]
    %v113 = vld [vmem:[%s2 + $0x2f8] sm:$0xff]
    %v114 = vld [vmem:[%s2 + $0x300] sm:$0xff]
    %v115 = vld [vmem:[%s2 + $0x308] sm:$0xff]
    %v116 = vld [vmem:[%s2 + $0x310] sm:$0xff]
    %v117 = vld [vmem:[%s2 + $0x318] sm:$0xff]
    %v118 = vld [vmem:[%s2 + $0x320] sm:$0xff]
    %v119 = vld [vmem:[%s2 + $0x328] sm:$0xff]
    %v120 = vld [vmem:[%s2 + $0x330] sm:$0xff]
    %v121 = vld [vmem:[%s2 + $0x338] sm:$0xff]
    %v122 = vld [vmem:[%s2 + $0x340] sm:$0xff]
    %v123 = vld [vmem:[%s2 + $0x348] sm:$0xff]
    %v124 = vld [vmem:[%s2 + $0x350] sm:$0xff]
    %v125 = vld [vmem:[%s2 + $0x358] sm:$0xff]
    %v126 = vld [vmem:[%s2 + $0x360] sm:$0xff]
    %v127 = vld [vmem:[%s2 + $0x368] sm:$0xff]
    %v128 = vld [vmem:[%s2 + $0x370] sm:$0xff]
    %v129 = vld [vmem:[%s2 + $0x378] sm:$0xff]
    %v130 = vld [vmem:[%s2 + $0x380] sm:$0xff]
    %v131 = vld [vmem:[%s2 + $0x388] sm:$0xff]
    %v132 = vld [vmem:[%s2 + $0x390] sm:$0xff]
    %v133 = vld [vmem:[%s2 + $0x398] sm:$0xff]
    %v134 = vld [vmem:[%s2 + $0x3a0] sm:$0xff]
    %v135 = vld [vmem:[%s2 + $0x3a8] sm:$0xff]
    %v136 = vld [vmem:[%s2 + $0x3b0] sm:$0xff]
    %v137 = vld [vmem:[%s2 + $0x3b8] sm:$0xff]
    %v138 = vld [vmem:[%s2 + $0x3c0] sm:$0xff]
    %v139 = vld [vmem:[%s2 + $0x3c8] sm:$0xff]
    %v140 = vld [vmem:[%s2 + $0x3d0] sm:$0xff]
    %v141 = vld [vmem:[%s2 + $0x3d8] sm:$0xff]
    %v142 = vld [vmem:[%s2 + $0x3e0] sm:$0xff]
    %v143 = vld [vmem:[%s2 + $0x3e8] sm:$0xff]
    %v144 = vld [vmem:[%s2 + $0x3f0] sm:$0xff]
    %v145 = vld [vmem:[%s2 + $0x3f8] sm:$0xff]
    %v146 = vld [vmem:[%s2 + $0x400] sm:$0xff]
    %v147 = vld [vmem:[%s2 + $0x408] sm:$0xff]
    %v148 = vld [vmem:[%s2 + $0x410] sm:$0xff]
    %v149 = vld [vmem:[%s2 + $0x418] sm:$0xff]
    %v150 = vld [vmem:[%s2 + $0x420] sm:$0xff]
    %v151 = vld [vmem:[%s2 + $0x428] sm:$0xff]
    %v152 = vld [vmem:[%s2 + $0x430] sm:$0xff]
    %v153 = vld [vmem:[%s2 + $0x438] sm:$0xff]
    %v154 = vld [vmem:[%s2 + $0x440] sm:$0xff]
    %v155 = vld [vmem:[%s2 + $0x448] sm:$0xff]
    %v156 = vld [vmem:[%s2 + $0x450] sm:$0xff]
    %v157 = vld [vmem:[%s2 + $0x458] sm:$0xff]
    %v158 = vld [vmem:[%s2 + $0x460] sm:$0xff]
    %v159 = vld [vmem:[%s2 + $0x468] sm:$0xff]
    %v160 = vld [vmem:[%s2 + $0x470] sm:$0xff]
    %v161 = vld [vmem:[%s2 + $0x478] sm:$0xff]
    %v162 = vld [vmem:[%s2 + $0x480] sm:$0xff]
    %v163 = vld [vmem:[%s2 + $0x488] sm:$0xff]
    %v164 = vld [vmem:[%s2 + $0x490] sm:$0xff]
    %v165 = vld [vmem:[%s2 + $0x498] sm:$0xff]
    %v166 = vld [vmem:[%s2 + $0x4a0] sm:$0xff]
    %v167 = vld [vmem:[%s2 + $0x4a8] sm:$0xff]
    %v168 = vld [vmem:[%s2 + $0x4b0] sm:$0xff]
    %v169 = vld [vmem:[%s2 + $0x4b8] sm:$0xff]
    %v170 = vld [vmem:[%s2 + $0x4c0] sm:$0xff]
    %v171 = vld [vmem:[%s2 + $0x4c8] sm:$0xff]
    %v172 = vld [vmem:[%s2 + $0x4d0] sm:$0xff]
    %v173 = vld [vmem:[%s2 + $0x4d8] sm:$0xff]
    %v174 = vld [vmem:[%s2 + $0x4e0] sm:$0xff]
    %v175 = vld [vmem:[%s2 + $0x4e8] sm:$0xff]
    %v176 = vld [vmem:[%s2 + $0x4f0] sm:$0xff]
    %v177 = vld [vmem:[%s2 + $0x4f8] sm:$0xff]
    %v178 = vld [vmem:[%s2 + $0x500] sm:$0xff]
    %v179 = vld [vmem:[%s2 + $0x508] sm:$0xff]
    %v180 = vld [vmem:[%s2 + $0x510] sm:$0xff]
    %v181 = vld [vmem:[%s2 + $0x518] sm:$0xff]
    %v182 = vld [vmem:[%s2 + $0x520] sm:$0xff]
    %v183 = vld [vmem:[%s2 + $0x528] sm:$0xff]
    %v184 = vld [vmem:[%s2 + $0x530] sm:$0xff]
    %v185 = vld [vmem:[%s2 + $0x538] sm:$0xff]
    %v186 = vld [vmem:[%s2 + $0x540] sm:$0xff]
    %v187 = vld [vmem:[%s2 + $0x548] sm:$0xff]
    %v188 = vld [vmem:[%s2 + $0x550] sm:$0xff]
    %v189 = vld [vmem:[%s2 + $0x558] sm:$0xff]
    %v190 = vld [vmem:[%s2 + $0x560] sm:$0xff]
    %v191 = vld [vmem:[%s2 + $0x568] sm:$0xff]
    %v192 = vld [vmem:[%s2 + $0x570] sm:$0xff]
    %v193 = vld [vmem:[%s2 + $0x578] sm:$0xff]
    %v194 = vld [vmem:[%s2 + $0x580] sm:$0xff]
    %v195 = vld [vmem:[%s2 + $0x588] sm:$0xff]
    %v196 = vld [vmem:[%s2 + $0x590] sm:$0xff]
    %v197 = vld [vmem:[%s2 + $0x598] sm:$0xff]
    %v198 = vld [vmem:[%s2 + $0x5a0] sm:$0xff]
    %v199 = vld [vmem:[%s2 + $0x5a8] sm:$0xff]
    %v200 = vld [vmem:[%s2 + $0x5b0] sm:$0xff]
    %v201 = vld [vmem:[%s2 + $0x5b8] sm:$0xff]
    %v202 = vld [vmem:[%s2 + $0x5c0] sm:$0xff]
    %v203 = vld [vmem:[%s2 + $0x5c8] sm:$0xff]
    %v204 = vld [vmem:[%s2 + $0x5d0] sm:$0xff]
    %v205 = vld [vmem:[%s2 + $0x5d8] sm:$0xff]
    %v206 = vld [vmem:[%s2 + $0x5e0] sm:$0xff]
    %v207 = vld [vmem:[%s2 + $0x5e8] sm:$0xff]
    %v208 = vld [vmem:[%s2 + $0x5f0] sm:$0xff]
    %v209 = vld [vmem:[%s2 + $0x5f8] sm:$0xff]
    %v210 = vld [vmem:[%s2 + $0x600] sm:$0xff]
    %v211 = vld [vmem:[%s2 + $0x608] sm:$0xff]
    %v212 = vld [vmem:[%s2 + $0x610] sm:$0xff]
    %v213 = vld [vmem:[%s2 + $0x618] sm:$0xff]
    %v214 = vld [vmem:[%s2 + $0x620] sm:$0xff]
    %v215 = vld [vmem:[%s2 + $0x628] sm:$0xff]
    %v216 = vld [vmem:[%s2 + $0x630] sm:$0xff]
    %v217 = vld [vmem:[%s2 + $0x638] sm:$0xff]
    %v218 = vld [vmem:[%s2 + $0x640] sm:$0xff]
    %v219 = vld [vmem:[%s2 + $0x648] sm:$0xff]
    %v220 = vld [vmem:[%s2 + $0x650] sm:$0xff]
    %v221 = vld [vmem:[%s2 + $0x658] sm:$0xff]
    %v222 = vld [vmem:[%s2 + $0x660] sm:$0xff]
    %v223 = vld [vmem:[%s2 + $0x668] sm:$0xff]
    %v224 = vld [vmem:[%s2 + $0x670] sm:$0xff]
    %v225 = vld [vmem:[%s2 + $0x678] sm:$0xff]
    %v226 = vld [vmem:[%s2 + $0x680] sm:$0xff]
    %v227 = vld [vmem:[%s2 + $0x688] sm:$0xff]
    %v228 = vld [vmem:[%s2 + $0x690] sm:$0xff]
    %v229 = vld [vmem:[%s2 + $0x698] sm:$0xff]
    %v230 = vld [vmem:[%s2 + $0x6a0] sm:$0xff]
    %v231 = vld [vmem:[%s2 + $0x6a8] sm:$0xff]
    %v232 = vld [vmem:[%s2 + $0x6b0] sm:$0xff]
    %v233 = vld [vmem:[%s2 + $0x6b8] sm:$0xff]
    %v234 = vld [vmem:[%s2 + $0x6c0] sm:$0xff]
    %v235 = vld [vmem:[%s2 + $0x6c8] sm:$0xff]
    %v236 = vld [vmem:[%s2 + $0x6d0] sm:$0xff]
    %v237 = vld [vmem:[%s2 + $0x6d8] sm:$0xff]
    %v238 = vld [vmem:[%s2 + $0x6e0] sm:$0xff]
    %v239 = vld [vmem:[%s2 + $0x6e8] sm:$0xff]
    %v240 = vld [vmem:[%s2 + $0x6f0] sm:$0xff]
    %v241 = vld [vmem:[%s2 + $0x6f8] sm:$0xff]
    %v242 = vld [vmem:[%s2 + $0x700] sm:$0xff]
    %v243 = vld [vmem:[%s2 + $0x708] sm:$0xff]
    %v244 = vld [vmem:[%s2 + $0x710] sm:$0xff]
    %v245 = vld [vmem:[%s2 + $0x718] sm:$0xff]
    %v246 = vld [vmem:[%s2 + $0x720] sm:$0xff]
    %v247 = vld [vmem:[%s2 + $0x728] sm:$0xff]
    %v248 = vld [vmem:[%s2 + $0x730] sm:$0xff]
    %v249 = vld [vmem:[%s2 + $0x738] sm:$0xff]
    %v250 = vld [vmem:[%s2 + $0x740] sm:$0xff]
    %v251 = vld [vmem:[%s2 + $0x748] sm:$0xff]
    %v252 = vld [vmem:[%s2 + $0x750] sm:$0xff]
    %v253 = vld [vmem:[%s2 + $0x758] sm:$0xff]
    %v254 = vld [vmem:[%s2 + $0x760] sm:$0xff]
    %v255 = vld [vmem:[%s2 + $0x768] sm:$0xff]
    %v256 = vld [vmem:[%s2 + $0x770] sm:$0xff]
    %v257 = vld [vmem:[%s2 + $0x778] sm:$0xff]
    %v258 = vld [vmem:[%s2 + $0x780] sm:$0xff]
    %v259 = vld [vmem:[%s2 + $0x788] sm:$0xff]
    %v260 = vld [vmem:[%s2 + $0x790] sm:$0xff]
    %v261 = vld [vmem:[%s2 + $0x798] sm:$0xff]
    %v262 = vld [vmem:[%s2 + $0x7a0] sm:$0xff]
    %v263 = vld [vmem:[%s2 + $0x7a8] sm:$0xff]
    %v264 = vld [vmem:[%s2 + $0x7b0] sm:$0xff]
    %v265 = vld [vmem:[%s2 + $0x7b8] sm:$0xff]
    %v266 = vld [vmem:[%s2 + $0x7c0] sm:$0xff]
    %v267 = vld [vmem:[%s2 + $0x7c8] sm:$0xff]
    %v268 = vld [vmem:[%s2 + $0x7d0] sm:$0xff]
    %v269 = vld [vmem:[%s2 + $0x7d8] sm:$0xff]
    %v270 = vld [vmem:[%s2 + $0x7e0] sm:$0xff]
    %v271 = vld [vmem:[%s2 + $0x7e8] sm:$0xff]
    %v272 = vld [vmem:[%s2 + $0x7f0] sm:$0xff]
    %v273 = vld [vmem:[%s2 + $0x7f8] sm:$0xff]
    %v274 = vld [vmem:[%s2 + $0x800] sm:$0xff]
    %v275 = vld [vmem:[%s2 + $0x808] sm:$0xff]
    %v276 = vld [vmem:[%s2 + $0x810] sm:$0xff]
    %v277 = vld [vmem:[%s2 + $0x818] sm:$0xff]
    %v278 = vld [vmem:[%s2 + $0x820] sm:$0xff]
    %v279 = vld [vmem:[%s2 + $0x828] sm:$0xff]
    %v280 = vld [vmem:[%s2 + $0x830] sm:$0xff]
    %v281 = vld [vmem:[%s2 + $0x838] sm:$0xff]
    %v282 = vld [vmem:[%s2 + $0x840] sm:$0xff]
    %v283 = vld [vmem:[%s2 + $0x848] sm:$0xff]
    %v284 = vld [vmem:[%s2 + $0x850] sm:$0xff]
    %v285 = vld [vmem:[%s2 + $0x858] sm:$0xff]
    %v286 = vld [vmem:[%s2 + $0x860] sm:$0xff]
    %v287 = vld [vmem:[%s2 + $0x868] sm:$0xff]
    %v288 = vld [vmem:[%s2 + $0x870] sm:$0xff]
    %v289 = vld [vmem:[%s2 + $0x878] sm:$0xff]
    %v290 = vld [vmem:[%s2 + $0x880] sm:$0xff]
    %v291 = vld [vmem:[%s2 + $0x888] sm:$0xff]
    %v292 = vld [vmem:[%s2 + $0x890] sm:$0xff]
    %v293 = vld [vmem:[%s2 + $0x898] sm:$0xff]
    %v294 = vld [vmem:[%s2 + $0x8a0] sm:$0xff]
    %v295 = vld [vmem:[%s2 + $0x8a8] sm:$0xff]
    %v296 = vld [vmem:[%s2 + $0x8b0] sm:$0xff]
    %v297 = vld [vmem:[%s2 + $0x8b8] sm:$0xff]
    %v298 = vld [vmem:[%s2 + $0x8c0] sm:$0xff]
    %v299 = vld [vmem:[%s2 + $0x8c8] sm:$0xff]
    %v300 = vld [vmem:[%s2 + $0x8d0] sm:$0xff]
    %v301 = vld [vmem:[%s2 + $0x8d8] sm:$0xff]
    %v302 = vld [vmem:[%s2 + $0x8e0] sm:$0xff]
    %v303 = vld [vmem:[%s2 + $0x8e8] sm:$0xff]
    %v304 = vld [vmem:[%s2 + $0x8f0] sm:$0xff]
    %v305 = vld [vmem:[%s2 + $0x8f8] sm:$0xff]
    %v306 = vld [vmem:[%s2 + $0x900] sm:$0xff]
    %v307 = vld [vmem:[%s2 + $0x908] sm:$0xff]
    %v308 = vld [vmem:[%s2 + $0x910] sm:$0xff]
    %v309 = vld [vmem:[%s2 + $0x918] sm:$0xff]
    %v310 = vld [vmem:[%s2 + $0x920] sm:$0xff]
    %v311 = vld [vmem:[%s2 + $0x928] sm:$0xff]
    %v312 = vld [vmem:[%s2 + $0x930] sm:$0xff]
    %v313 = vld [vmem:[%s2 + $0x938] sm:$0xff]
    %v314 = vld [vmem:[%s2 + $0x940] sm:$0xff]
    %v315 = vld [vmem:[%s2 + $0x948] sm:$0xff]
    %v316 = vld [vmem:[%s2 + $0x950] sm:$0xff]
    %v317 = vld [vmem:[%s2 + $0x958] sm:$0xff]
    %v318 = vld [vmem:[%s2 + $0x960] sm:$0xff]
    %v319 = vld [vmem:[%s2 + $0x968] sm:$0xff]
    %v320 = vld [vmem:[%s2 + $0x970] sm:$0xff]
    %v321 = vld [vmem:[%s2 + $0x978] sm:$0xff]
    %v322 = vld [vmem:[%s2 + $0x980] sm:$0xff]
    %v323 = vld [vmem:[%s2 + $0x988] sm:$0xff]
    %v324 = vld [vmem:[%s2 + $0x990] sm:$0xff]
    %v325 = vld [vmem:[%s2 + $0x998] sm:$0xff]
    %v326 = vld [vmem:[%s2 + $0x9a0] sm:$0xff]
    %v327 = vld [vmem:[%s2 + $0x9a8] sm:$0xff]
    %v328 = vld [vmem:[%s2 + $0x9b0] sm:$0xff]
    %v329 = vld [vmem:[%s2 + $0x9b8] sm:$0xff]
    %v330 = vld [vmem:[%s2 + $0x9c0] sm:$0xff]
    %v331 = vld [vmem:[%s2 + $0x9c8] sm:$0xff]
    %v332 = vld [vmem:[%s2 + $0x9d0] sm:$0xff]
    %v333 = vld [vmem:[%s2 + $0x9d8] sm:$0xff]
    %v334 = vld [vmem:[%s2 + $0x9e0] sm:$0xff]
    %v335 = vld [vmem:[%s2 + $0x9e8] sm:$0xff]
    %v336 = vld [vmem:[%s2 + $0x9f0] sm:$0xff]
    %v337 = vld [vmem:[%s2 + $0x9f8] sm:$0xff]
    %v338 = vld [vmem:[%s2 + $0xa00] sm:$0xff]
    %v339 = vld [vmem:[%s2 + $0xa08] sm:$0xff]
    %v340 = vld [vmem:[%s2 + $0xa10] sm:$0xff]
    %v341 = vld [vmem:[%s2 + $0xa18] sm:$0xff]
    %v342 = vld [vmem:[%s2 + $0xa20] sm:$0xff]
    %v343 = vld [vmem:[%s2 + $0xa28] sm:$0xff]
    %v344 = vld [vmem:[%s2 + $0xa30] sm:$0xff]
    %v345 = vld [vmem:[%s2 + $0xa38] sm:$0xff]
    %v346 = vld [vmem:[%s2 + $0xa40] sm:$0xff]
    %v347 = vld [vmem:[%s2 + $0xa48] sm:$0xff]
    %v348 = vld [vmem:[%s2 + $0xa50] sm:$0xff]
    %v349 = vld [vmem:[%s2 + $0xa58] sm:$0xff]
    %v350 = vld [vmem:[%s2 + $0xa60] sm:$0xff]
    %v351 = vld [vmem:[%s2 + $0xa68] sm:$0xff]
    %v352 = vld [vmem:[%s2 + $0xa70] sm:$0xff]
    %v353 = vld [vmem:[%s2 + $0xa78] sm:$0xff]
    %v354 = vld [vmem:[%s2 + $0xa80] sm:$0xff]
    %v355 = vld [vmem:[%s2 + $0xa88] sm:$0xff]
    %v356 = vld [vmem:[%s2 + $0xa90] sm:$0xff]
    %v357 = vld [vmem:[%s2 + $0xa98] sm:$0xff]
    %v358 = vld [vmem:[%s2 + $0xaa0] sm:$0xff]
    %v359 = vld [vmem:[%s2 + $0xaa8] sm:$0xff]
    %v360 = vld [vmem:[%s2 + $0xab0] sm:$0xff]
    %v361 = vld [vmem:[%s2 + $0xab8] sm:$0xff]
    %v362 = vld [vmem:[%s2 + $0xac0] sm:$0xff]
    %v363 = vld [vmem:[%s2 + $0xac8] sm:$0xff]
    %v364 = vld [vmem:[%s2 + $0xad0] sm:$0xff]
    %v365 = vld [vmem:[%s2 + $0xad8] sm:$0xff]
    %v366 = vld [vmem:[%s2 + $0xae0] sm:$0xff]
    %v367 = vld [vmem:[%s2 + $0xae8] sm:$0xff]
    %v368 = vld [vmem:[%s2 + $0xaf0] sm:$0xff]
    %v369 = vld [vmem:[%s2 + $0xaf8] sm:$0xff]
    %v370 = vld [vmem:[%s2 + $0xb00] sm:$0xff]
    %v371 = vld [vmem:[%s2 + $0xb08] sm:$0xff]
    %v372 = vld [vmem:[%s2 + $0xb10] sm:$0xff]
    %v373 = vld [vmem:[%s2 + $0xb18] sm:$0xff]
    %v374 = vld [vmem:[%s2 + $0xb20] sm:$0xff]
    %v375 = vld [vmem:[%s2 + $0xb28] sm:$0xff]
    %v376 = vld [vmem:[%s2 + $0xb30] sm:$0xff]
    %v377 = vld [vmem:[%s2 + $0xb38] sm:$0xff]
    %v378 = vld [vmem:[%s2 + $0xb40] sm:$0xff]
    %v379 = vld [vmem:[%s2 + $0xb48] sm:$0xff]
    %v380 = vld [vmem:[%s2 + $0xb50] sm:$0xff]
    %v381 = vld [vmem:[%s2 + $0xb58] sm:$0xff]
    %v382 = vld [vmem:[%s2 + $0xb60] sm:$0xff]
    %v383 = vld [vmem:[%s2 + $0xb68] sm:$0xff]
    %v384 = vld [vmem:[%s2 + $0xb70] sm:$0xff]
    %v385 = vld [vmem:[%s2 + $0xb78] sm:$0xff]
    %v386 = vld [vmem:[%s2 + $0xb80] sm:$0xff]
    %v387 = vld [vmem:[%s2 + $0xb88] sm:$0xff]
    %v388 = vld [vmem:[%s2 + $0xb90] sm:$0xff]
    %v389 = vld [vmem:[%s2 + $0xb98] sm:$0xff]
    %v390 = vld [vmem:[%s2 + $0xba0] sm:$0xff]
    %v391 = vld [vmem:[%s2 + $0xba8] sm:$0xff]
    %v392 = vld [vmem:[%s2 + $0xbb0] sm:$0xff]
    %v393 = vld [vmem:[%s2 + $0xbb8] sm:$0xff]
    %v394 = vld [vmem:[%s2 + $0xbc0] sm:$0xff]
    %v395 = vld [vmem:[%s2 + $0xbc8] sm:$0xff]
    %v396 = vld [vmem:[%s2 + $0xbd0] sm:$0xff]
    %v397 = vld [vmem:[%s2 + $0xbd8] sm:$0xff]
    %v398 = vld [vmem:[%s2 + $0xbe0] sm:$0xff]
    %v399 = vld [vmem:[%s2 + $0xbe8] sm:$0xff]
    %v400 = vld [vmem:[%s2 + $0xbf0] sm:$0xff]
    %v401 = vld [vmem:[%s2 + $0xbf8] sm:$0xff]
    %v402 = vld [vmem:[%s2 + $0xc00] sm:$0xff]
    %v403 = vld [vmem:[%s2 + $0xc08] sm:$0xff]
    %v404 = vld [vmem:[%s2 + $0xc10] sm:$0xff]
    %v405 = vld [vmem:[%s2 + $0xc18] sm:$0xff]
    %v406 = vld [vmem:[%s2 + $0xc20] sm:$0xff]
    %v407 = vld [vmem:[%s2 + $0xc28] sm:$0xff]
    %v408 = vld [vmem:[%s2 + $0xc30] sm:$0xff]
    %v409 = vld [vmem:[%s2 + $0xc38] sm:$0xff]
    %v410 = vld [vmem:[%s2 + $0xc40] sm:$0xff]
    %v411 = vld [vmem:[%s2 + $0xc48] sm:$0xff]
    %v412 = vld [vmem:[%s2 + $0xc50] sm:$0xff]
    %v413 = vld [vmem:[%s2 + $0xc58] sm:$0xff]
    %v414 = vld [vmem:[%s2 + $0xc60] sm:$0xff]
    %v415 = vld [vmem:[%s2 + $0xc68] sm:$0xff]
    %v416 = vld [vmem:[%s2 + $0xc70] sm:$0xff]
    %v417 = vld [vmem:[%s2 + $0xc78] sm:$0xff]
    %v418 = vld [vmem:[%s2 + $0xc80] sm:$0xff]
    %v419 = vld [vmem:[%s2 + $0xc88] sm:$0xff]
    %v420 = vld [vmem:[%s2 + $0xc90] sm:$0xff]
    %v421 = vld [vmem:[%s2 + $0xc98] sm:$0xff]
    %v422 = vld [vmem:[%s2 + $0xca0] sm:$0xff]
    %v423 = vld [vmem:[%s2 + $0xca8] sm:$0xff]
    %v424 = vld [vmem:[%s2 + $0xcb0] sm:$0xff]
    %v425 = vld [vmem:[%s2 + $0xcb8] sm:$0xff]
    %v426 = vld [vmem:[%s2 + $0xcc0] sm:$0xff]
    %v427 = vld [vmem:[%s2 + $0xcc8] sm:$0xff]
    %v428 = vld [vmem:[%s2 + $0xcd0] sm:$0xff]
    %v429 = vld [vmem:[%s2 + $0xcd8] sm:$0xff]
    %v430 = vld [vmem:[%s2 + $0xce0] sm:$0xff]
    %v431 = vld [vmem:[%s2 + $0xce8] sm:$0xff]
    %v432 = vld [vmem:[%s2 + $0xcf0] sm:$0xff]
    %v433 = vld [vmem:[%s2 + $0xcf8] sm:$0xff]
    %v434 = vld [vmem:[%s2 + $0xd00] sm:$0xff]
    %v435 = vld [vmem:[%s2 + $0xd08] sm:$0xff]
    %v436 = vld [vmem:[%s2 + $0xd10] sm:$0xff]
    %v437 = vld [vmem:[%s2 + $0xd18] sm:$0xff]
    %v438 = vld [vmem:[%s2 + $0xd20] sm:$0xff]
    %v439 = vld [vmem:[%s2 + $0xd28] sm:$0xff]
    %v440 = vld [vmem:[%s2 + $0xd30] sm:$0xff]
    %v441 = vld [vmem:[%s2 + $0xd38] sm:$0xff]
    %v442 = vld [vmem:[%s2 + $0xd40] sm:$0xff]
    %v443 = vld [vmem:[%s2 + $0xd48] sm:$0xff]
    %v444 = vld [vmem:[%s2 + $0xd50] sm:$0xff]
    %v445 = vld [vmem:[%s2 + $0xd58] sm:$0xff]
    %v446 = vld [vmem:[%s2 + $0xd60] sm:$0xff]
    %v447 = vld [vmem:[%s2 + $0xd68] sm:$0xff]
    %v448 = vld [vmem:[%s2 + $0xd70] sm:$0xff]
    %v449 = vld [vmem:[%s2 + $0xd78] sm:$0xff]
    %v450 = vld [vmem:[%s2 + $0xd80] sm:$0xff]
    %v451 = vld [vmem:[%s2 + $0xd88] sm:$0xff]
    %v452 = vld [vmem:[%s2 + $0xd90] sm:$0xff]
    %v453 = vld [vmem:[%s2 + $0xd98] sm:$0xff]
    %v454 = vld [vmem:[%s2 + $0xda0] sm:$0xff]
    %v455 = vld [vmem:[%s2 + $0xda8] sm:$0xff]
    %v456 = vld [vmem:[%s2 + $0xdb0] sm:$0xff]
    %v457 = vld [vmem:[%s2 + $0xdb8] sm:$0xff]
    %v458 = vld [vmem:[%s2 + $0xdc0] sm:$0xff]
    %v459 = vld [vmem:[%s2 + $0xdc8] sm:$0xff]
    %v460 = vld [vmem:[%s2 + $0xdd0] sm:$0xff]
    %v461 = vld [vmem:[%s2 + $0xdd8] sm:$0xff]
    %v462 = vld [vmem:[%s2 + $0xde0] sm:$0xff]
    %v463 = vld [vmem:[%s2 + $0xde8] sm:$0xff]
    %v464 = vld [vmem:[%s2 + $0xdf0] sm:$0xff]
    %v465 = vld [vmem:[%s2 + $0xdf8] sm:$0xff]
    %v466 = vld [vmem:[%s2 + $0xe00] sm:$0xff]
    %v467 = vld [vmem:[%s2 + $0xe08] sm:$0xff]
    %v468 = vld [vmem:[%s2 + $0xe10] sm:$0xff]
    %v469 = vld [vmem:[%s2 + $0xe18] sm:$0xff]
    %v470 = vld [vmem:[%s2 + $0xe20] sm:$0xff]
    %v471 = vld [vmem:[%s2 + $0xe28] sm:$0xff]
    %v472 = vld [vmem:[%s2 + $0xe30] sm:$0xff]
    %v473 = vld [vmem:[%s2 + $0xe38] sm:$0xff]
    %v474 = vld [vmem:[%s2 + $0xe40] sm:$0xff]
    %v475 = vld [vmem:[%s2 + $0xe48] sm:$0xff]
    %v476 = vld [vmem:[%s2 + $0xe50] sm:$0xff]
    %v477 = vld [vmem:[%s2 + $0xe58] sm:$0xff]
    %v478 = vld [vmem:[%s2 + $0xe60] sm:$0xff]
    %v479 = vld [vmem:[%s2 + $0xe68] sm:$0xff]
    %v480 = vld [vmem:[%s2 + $0xe70] sm:$0xff]
    %v481 = vld [vmem:[%s2 + $0xe78] sm:$0xff]
    %v482 = vld [vmem:[%s2 + $0xe80] sm:$0xff]
    %v483 = vld [vmem:[%s2 + $0xe88] sm:$0xff]
    %v484 = vld [vmem:[%s2 + $0xe90] sm:$0xff]
    %v485 = vld [vmem:[%s2 + $0xe98] sm:$0xff]
    %v486 = vld [vmem:[%s2 + $0xea0] sm:$0xff]
    %v487 = vld [vmem:[%s2 + $0xea8] sm:$0xff]
    %v488 = vld [vmem:[%s2 + $0xeb0] sm:$0xff]
    %v489 = vld [vmem:[%s2 + $0xeb8] sm:$0xff]
    %v490 = vld [vmem:[%s2 + $0xec0] sm:$0xff]
    %v491 = vld [vmem:[%s2 + $0xec8] sm:$0xff]
    %v492 = vld [vmem:[%s2 + $0xed0] sm:$0xff]
    %v493 = vld [vmem:[%s2 + $0xed8] sm:$0xff]
    %v494 = vld [vmem:[%s2 + $0xee0] sm:$0xff]
    %v495 = vld [vmem:[%s2 + $0xee8] sm:$0xff]
    %v496 = vld [vmem:[%s2 + $0xef0] sm:$0xff]
    %v497 = vld [vmem:[%s2 + $0xef8] sm:$0xff]
    %v498 = vld [vmem:[%s2 + $0xf00] sm:$0xff]
    %v499 = vld [vmem:[%s2 + $0xf08] sm:$0xff]
    %v500 = vld [vmem:[%s2 + $0xf10] sm:$0xff]
    %v501 = vld [vmem:[%s2 + $0xf18] sm:$0xff]
    %v502 = vld [vmem:[%s2 + $0xf20] sm:$0xff]
    %v503 = vld [vmem:[%s2 + $0xf28] sm:$0xff]
    %v504 = vld [vmem:[%s2 + $0xf30] sm:$0xff]
    %v505 = vld [vmem:[%s2 + $0xf38] sm:$0xff]
    %v506 = vld [vmem:[%s2 + $0xf40] sm:$0xff]
    %v507 = vld [vmem:[%s2 + $0xf48] sm:$0xff]
    %v508 = vld [vmem:[%s2 + $0xf50] sm:$0xff]
    %v509 = vld [vmem:[%s2 + $0xf58] sm:$0xff]
    %v510 = vld [vmem:[%s2 + $0xf60] sm:$0xff]
    %v511 = vld [vmem:[%s2 + $0xf68] sm:$0xff]
    %v512 = vld [vmem:[%s2 + $0xf70] sm:$0xff]
    %v513 = vld [vmem:[%s2 + $0xf78] sm:$0xff]
    %v514 = vld [vmem:[%s2 + $0xf80] sm:$0xff]
    %v515 = vld [vmem:[%s2 + $0xf88] sm:$0xff]
    %v516 = vld [vmem:[%s2 + $0xf90] sm:$0xff]
    %v517 = vld [vmem:[%s2 + $0xf98] sm:$0xff]
    %v518 = vld [vmem:[%s2 + $0xfa0] sm:$0xff]
    %v519 = vld [vmem:[%s2 + $0xfa8] sm:$0xff]
    %v520 = vld [vmem:[%s2 + $0xfb0] sm:$0xff]
    %v521 = vld [vmem:[%s2 + $0xfb8] sm:$0xff]
    %v522 = vld [vmem:[%s2 + $0xfc0] sm:$0xff]
    %v523 = vld [vmem:[%s2 + $0xfc8] sm:$0xff]
    %v524 = vld [vmem:[%s2 + $0xfd0] sm:$0xff]
    %v525 = vld [vmem:[%s2 + $0xfd8] sm:$0xff]
    %v526 = vld [vmem:[%s2 + $0xfe0] sm:$0xff]
    %v527 = vld [vmem:[%s2 + $0xfe8] sm:$0xff]
    %v528 = vld [vmem:[%s2 + $0xff0] sm:$0xff]
    %v529 = vld [vmem:[%s2 + $0xff8] sm:$0xff]
    %v530 = vstv %s16
    %v531 = vmul.f32 %v18, %v530
    %v532 = vmul.f32 %v19, %v530
    %v533 = vmul.f32 %v20, %v530
    %v534 = vmul.f32 %v21, %v530
    %v535 = vmul.f32 %v22, %v530
    %v536 = vmul.f32 %v23, %v530
    %v537 = vmul.f32 %v24, %v530
    %v538 = vmul.f32 %v25, %v530
    %v539 = vmul.f32 %v26, %v530
    %v540 = vmul.f32 %v27, %v530
    %v541 = vmul.f32 %v28, %v530
    %v542 = vmul.f32 %v29, %v530
    %v543 = vmul.f32 %v30, %v530
    %v544 = vmul.f32 %v31, %v530
    %v545 = vmul.f32 %v32, %v530
    %v546 = vmul.f32 %v33, %v530
    %v547 = vmul.f32 %v34, %v530
    %v548 = vmul.f32 %v35, %v530
    %v549 = vmul.f32 %v36, %v530
    %v550 = vmul.f32 %v37, %v530
    %v551 = vmul.f32 %v38, %v530
    %v552 = vmul.f32 %v39, %v530
    %v553 = vmul.f32 %v40, %v530
    %v554 = vmul.f32 %v41, %v530
    %v555 = vmul.f32 %v42, %v530
    %v556 = vmul.f32 %v43, %v530
    %v557 = vmul.f32 %v44, %v530
    %v558 = vmul.f32 %v45, %v530
    %v559 = vmul.f32 %v46, %v530
    %v560 = vmul.f32 %v47, %v530
    %v561 = vmul.f32 %v48, %v530
    %v562 = vmul.f32 %v49, %v530
    %v563 = vmul.f32 %v50, %v530
    %v564 = vmul.f32 %v51, %v530
    %v565 = vmul.f32 %v52, %v530
    %v566 = vmul.f32 %v53, %v530
    %v567 = vmul.f32 %v54, %v530
    %v568 = vmul.f32 %v55, %v530
    %v569 = vmul.f32 %v56, %v530
    %v570 = vmul.f32 %v57, %v530
    %v571 = vmul.f32 %v58, %v530
    %v572 = vmul.f32 %v59, %v530
    %v573 = vmul.f32 %v60, %v530
    %v574 = vmul.f32 %v61, %v530
    %v575 = vmul.f32 %v62, %v530
    %v576 = vmul.f32 %v63, %v530
    %v577 = vmul.f32 %v64, %v530
    %v578 = vmul.f32 %v65, %v530
    %v579 = vmul.f32 %v66, %v530
    %v580 = vmul.f32 %v67, %v530
    %v581 = vmul.f32 %v68, %v530
    %v582 = vmul.f32 %v69, %v530
    %v583 = vmul.f32 %v70, %v530
    %v584 = vmul.f32 %v71, %v530
    %v585 = vmul.f32 %v72, %v530
    %v586 = vmul.f32 %v73, %v530
    %v587 = vmul.f32 %v74, %v530
    %v588 = vmul.f32 %v75, %v530
    %v589 = vmul.f32 %v76, %v530
    %v590 = vmul.f32 %v77, %v530
    %v591 = vmul.f32 %v78, %v530
    %v592 = vmul.f32 %v79, %v530
    %v593 = vmul.f32 %v80, %v530
    %v594 = vmul.f32 %v81, %v530
    %v595 = vmul.f32 %v82, %v530
    %v596 = vmul.f32 %v83, %v530
    %v597 = vmul.f32 %v84, %v530
    %v598 = vmul.f32 %v85, %v530
    %v599 = vmul.f32 %v86, %v530
    %v600 = vmul.f32 %v87, %v530
    %v601 = vmul.f32 %v88, %v530
    %v602 = vmul.f32 %v89, %v530
    %v603 = vmul.f32 %v90, %v530
    %v604 = vmul.f32 %v91, %v530
    %v605 = vmul.f32 %v92, %v530
    %v606 = vmul.f32 %v93, %v530
    %v607 = vmul.f32 %v94, %v530
    %v608 = vmul.f32 %v95, %v530
    %v609 = vmul.f32 %v96, %v530
    %v610 = vmul.f32 %v97, %v530
    %v611 = vmul.f32 %v98, %v530
    %v612 = vmul.f32 %v99, %v530
    %v613 = vmul.f32 %v100, %v530
    %v614 = vmul.f32 %v101, %v530
    %v615 = vmul.f32 %v102, %v530
    %v616 = vmul.f32 %v103, %v530
    %v617 = vmul.f32 %v104, %v530
    %v618 = vmul.f32 %v105, %v530
    %v619 = vmul.f32 %v106, %v530
    %v620 = vmul.f32 %v107, %v530
    %v621 = vmul.f32 %v108, %v530
    %v622 = vmul.f32 %v109, %v530
    %v623 = vmul.f32 %v110, %v530
    %v624 = vmul.f32 %v111, %v530
    %v625 = vmul.f32 %v112, %v530
    %v626 = vmul.f32 %v113, %v530
    %v627 = vmul.f32 %v114, %v530
    %v628 = vmul.f32 %v115, %v530
    %v629 = vmul.f32 %v116, %v530
    %v630 = vmul.f32 %v117, %v530
    %v631 = vmul.f32 %v118, %v530
    %v632 = vmul.f32 %v119, %v530
    %v633 = vmul.f32 %v120, %v530
    %v634 = vmul.f32 %v121, %v530
    %v635 = vmul.f32 %v122, %v530
    %v636 = vmul.f32 %v123, %v530
    %v637 = vmul.f32 %v124, %v530
    %v638 = vmul.f32 %v125, %v530
    %v639 = vmul.f32 %v126, %v530
    %v640 = vmul.f32 %v127, %v530
    %v641 = vmul.f32 %v128, %v530
    %v642 = vmul.f32 %v129, %v530
    %v643 = vmul.f32 %v130, %v530
    %v644 = vmul.f32 %v131, %v530
    %v645 = vmul.f32 %v132, %v530
    %v646 = vmul.f32 %v133, %v530
    %v647 = vmul.f32 %v134, %v530
    %v648 = vmul.f32 %v135, %v530
    %v649 = vmul.f32 %v136, %v530
    %v650 = vmul.f32 %v137, %v530
    %v651 = vmul.f32 %v138, %v530
    %v652 = vmul.f32 %v139, %v530
    %v653 = vmul.f32 %v140, %v530
    %v654 = vmul.f32 %v141, %v530
    %v655 = vmul.f32 %v142, %v530
    %v656 = vmul.f32 %v143, %v530
    %v657 = vmul.f32 %v144, %v530
    %v658 = vmul.f32 %v145, %v530
    %v659 = vmul.f32 %v146, %v530
    %v660 = vmul.f32 %v147, %v530
    %v661 = vmul.f32 %v148, %v530
    %v662 = vmul.f32 %v149, %v530
    %v663 = vmul.f32 %v150, %v530
    %v664 = vmul.f32 %v151, %v530
    %v665 = vmul.f32 %v152, %v530
    %v666 = vmul.f32 %v153, %v530
    %v667 = vmul.f32 %v154, %v530
    %v668 = vmul.f32 %v155, %v530
    %v669 = vmul.f32 %v156, %v530
    %v670 = vmul.f32 %v157, %v530
    %v671 = vmul.f32 %v158, %v530
    %v672 = vmul.f32 %v159, %v530
    %v673 = vmul.f32 %v160, %v530
    %v674 = vmul.f32 %v161, %v530
    %v675 = vmul.f32 %v162, %v530
    %v676 = vmul.f32 %v163, %v530
    %v677 = vmul.f32 %v164, %v530
    %v678 = vmul.f32 %v165, %v530
    %v679 = vmul.f32 %v166, %v530
    %v680 = vmul.f32 %v167, %v530
    %v681 = vmul.f32 %v168, %v530
    %v682 = vmul.f32 %v169, %v530
    %v683 = vmul.f32 %v170, %v530
    %v684 = vmul.f32 %v171, %v530
    %v685 = vmul.f32 %v172, %v530
    %v686 = vmul.f32 %v173, %v530
    %v687 = vmul.f32 %v174, %v530
    %v688 = vmul.f32 %v175, %v530
    %v689 = vmul.f32 %v176, %v530
    %v690 = vmul.f32 %v177, %v530
    %v691 = vmul.f32 %v178, %v530
    %v692 = vmul.f32 %v179, %v530
    %v693 = vmul.f32 %v180, %v530
    %v694 = vmul.f32 %v181, %v530
    %v695 = vmul.f32 %v182, %v530
    %v696 = vmul.f32 %v183, %v530
    %v697 = vmul.f32 %v184, %v530
    %v698 = vmul.f32 %v185, %v530
    %v699 = vmul.f32 %v186, %v530
    %v700 = vmul.f32 %v187, %v530
    %v701 = vmul.f32 %v188, %v530
    %v702 = vmul.f32 %v189, %v530
    %v703 = vmul.f32 %v190, %v530
    %v704 = vmul.f32 %v191, %v530
    %v705 = vmul.f32 %v192, %v530
    %v706 = vmul.f32 %v193, %v530
    %v707 = vmul.f32 %v194, %v530
    %v708 = vmul.f32 %v195, %v530
    %v709 = vmul.f32 %v196, %v530
    %v710 = vmul.f32 %v197, %v530
    %v711 = vmul.f32 %v198, %v530
    %v712 = vmul.f32 %v199, %v530
    %v713 = vmul.f32 %v200, %v530
    %v714 = vmul.f32 %v201, %v530
    %v715 = vmul.f32 %v202, %v530
    %v716 = vmul.f32 %v203, %v530
    %v717 = vmul.f32 %v204, %v530
    %v718 = vmul.f32 %v205, %v530
    %v719 = vmul.f32 %v206, %v530
    %v720 = vmul.f32 %v207, %v530
    %v721 = vmul.f32 %v208, %v530
    %v722 = vmul.f32 %v209, %v530
    %v723 = vmul.f32 %v210, %v530
    %v724 = vmul.f32 %v211, %v530
    %v725 = vmul.f32 %v212, %v530
    %v726 = vmul.f32 %v213, %v530
    %v727 = vmul.f32 %v214, %v530
    %v728 = vmul.f32 %v215, %v530
    %v729 = vmul.f32 %v216, %v530
    %v730 = vmul.f32 %v217, %v530
    %v731 = vmul.f32 %v218, %v530
    %v732 = vmul.f32 %v219, %v530
    %v733 = vmul.f32 %v220, %v530
    %v734 = vmul.f32 %v221, %v530
    %v735 = vmul.f32 %v222, %v530
    %v736 = vmul.f32 %v223, %v530
    %v737 = vmul.f32 %v224, %v530
    %v738 = vmul.f32 %v225, %v530
    %v739 = vmul.f32 %v226, %v530
    %v740 = vmul.f32 %v227, %v530
    %v741 = vmul.f32 %v228, %v530
    %v742 = vmul.f32 %v229, %v530
    %v743 = vmul.f32 %v230, %v530
    %v744 = vmul.f32 %v231, %v530
    %v745 = vmul.f32 %v232, %v530
    %v746 = vmul.f32 %v233, %v530
    %v747 = vmul.f32 %v234, %v530
    %v748 = vmul.f32 %v235, %v530
    %v749 = vmul.f32 %v236, %v530
    %v750 = vmul.f32 %v237, %v530
    %v751 = vmul.f32 %v238, %v530
    %v752 = vmul.f32 %v239, %v530
    %v753 = vmul.f32 %v240, %v530
    %v754 = vmul.f32 %v241, %v530
    %v755 = vmul.f32 %v242, %v530
    %v756 = vmul.f32 %v243, %v530
    %v757 = vmul.f32 %v244, %v530
    %v758 = vmul.f32 %v245, %v530
    %v759 = vmul.f32 %v246, %v530
    %v760 = vmul.f32 %v247, %v530
    %v761 = vmul.f32 %v248, %v530
    %v762 = vmul.f32 %v249, %v530
    %v763 = vmul.f32 %v250, %v530
    %v764 = vmul.f32 %v251, %v530
    %v765 = vmul.f32 %v252, %v530
    %v766 = vmul.f32 %v253, %v530
    %v767 = vmul.f32 %v254, %v530
    %v768 = vmul.f32 %v255, %v530
    %v769 = vmul.f32 %v256, %v530
    %v770 = vmul.f32 %v257, %v530
    %v771 = vmul.f32 %v258, %v530
    %v772 = vmul.f32 %v259, %v530
    %v773 = vmul.f32 %v260, %v530
    %v774 = vmul.f32 %v261, %v530
    %v775 = vmul.f32 %v262, %v530
    %v776 = vmul.f32 %v263, %v530
    %v777 = vmul.f32 %v264, %v530
    %v778 = vmul.f32 %v265, %v530
    %v779 = vmul.f32 %v266, %v530
    %v780 = vmul.f32 %v267, %v530
    %v781 = vmul.f32 %v268, %v530
    %v782 = vmul.f32 %v269, %v530
    %v783 = vmul.f32 %v270, %v530
    %v784 = vmul.f32 %v271, %v530
    %v785 = vmul.f32 %v272, %v530
    %v786 = vmul.f32 %v273, %v530
    %v787 = vmul.f32 %v274, %v530
    %v788 = vmul.f32 %v275, %v530
    %v789 = vmul.f32 %v276, %v530
    %v790 = vmul.f32 %v277, %v530
    %v791 = vmul.f32 %v278, %v530
    %v792 = vmul.f32 %v279, %v530
    %v793 = vmul.f32 %v280, %v530
    %v794 = vmul.f32 %v281, %v530
    %v795 = vmul.f32 %v282, %v530
    %v796 = vmul.f32 %v283, %v530
    %v797 = vmul.f32 %v284, %v530
    %v798 = vmul.f32 %v285, %v530
    %v799 = vmul.f32 %v286, %v530
    %v800 = vmul.f32 %v287, %v530
    %v801 = vmul.f32 %v288, %v530
    %v802 = vmul.f32 %v289, %v530
    %v803 = vmul.f32 %v290, %v530
    %v804 = vmul.f32 %v291, %v530
    %v805 = vmul.f32 %v292, %v530
    %v806 = vmul.f32 %v293, %v530
    %v807 = vmul.f32 %v294, %v530
    %v808 = vmul.f32 %v295, %v530
    %v809 = vmul.f32 %v296, %v530
    %v810 = vmul.f32 %v297, %v530
    %v811 = vmul.f32 %v298, %v530
    %v812 = vmul.f32 %v299, %v530
    %v813 = vmul.f32 %v300, %v530
    %v814 = vmul.f32 %v301, %v530
    %v815 = vmul.f32 %v302, %v530
    %v816 = vmul.f32 %v303, %v530
    %v817 = vmul.f32 %v304, %v530
    %v818 = vmul.f32 %v305, %v530
    %v819 = vmul.f32 %v306, %v530
    %v820 = vmul.f32 %v307, %v530
    %v821 = vmul.f32 %v308, %v530
    %v822 = vmul.f32 %v309, %v530
    %v823 = vmul.f32 %v310, %v530
    %v824 = vmul.f32 %v311, %v530
    %v825 = vmul.f32 %v312, %v530
    %v826 = vmul.f32 %v313, %v530
    %v827 = vmul.f32 %v314, %v530
    %v828 = vmul.f32 %v315, %v530
    %v829 = vmul.f32 %v316, %v530
    %v830 = vmul.f32 %v317, %v530
    %v831 = vmul.f32 %v318, %v530
    %v832 = vmul.f32 %v319, %v530
    %v833 = vmul.f32 %v320, %v530
    %v834 = vmul.f32 %v321, %v530
    %v835 = vmul.f32 %v322, %v530
    %v836 = vmul.f32 %v323, %v530
    %v837 = vmul.f32 %v324, %v530
    %v838 = vmul.f32 %v325, %v530
    %v839 = vmul.f32 %v326, %v530
    %v840 = vmul.f32 %v327, %v530
    %v841 = vmul.f32 %v328, %v530
    %v842 = vmul.f32 %v329, %v530
    %v843 = vmul.f32 %v330, %v530
    %v844 = vmul.f32 %v331, %v530
    %v845 = vmul.f32 %v332, %v530
    %v846 = vmul.f32 %v333, %v530
    %v847 = vmul.f32 %v334, %v530
    %v848 = vmul.f32 %v335, %v530
    %v849 = vmul.f32 %v336, %v530
    %v850 = vmul.f32 %v337, %v530
    %v851 = vmul.f32 %v338, %v530
    %v852 = vmul.f32 %v339, %v530
    %v853 = vmul.f32 %v340, %v530
    %v854 = vmul.f32 %v341, %v530
    %v855 = vmul.f32 %v342, %v530
    %v856 = vmul.f32 %v343, %v530
    %v857 = vmul.f32 %v344, %v530
    %v858 = vmul.f32 %v345, %v530
    %v859 = vmul.f32 %v346, %v530
    %v860 = vmul.f32 %v347, %v530
    %v861 = vmul.f32 %v348, %v530
    %v862 = vmul.f32 %v349, %v530
    %v863 = vmul.f32 %v350, %v530
    %v864 = vmul.f32 %v351, %v530
    %v865 = vmul.f32 %v352, %v530
    %v866 = vmul.f32 %v353, %v530
    %v867 = vmul.f32 %v354, %v530
    %v868 = vmul.f32 %v355, %v530
    %v869 = vmul.f32 %v356, %v530
    %v870 = vmul.f32 %v357, %v530
    %v871 = vmul.f32 %v358, %v530
    %v872 = vmul.f32 %v359, %v530
    %v873 = vmul.f32 %v360, %v530
    %v874 = vmul.f32 %v361, %v530
    %v875 = vmul.f32 %v362, %v530
    %v876 = vmul.f32 %v363, %v530
    %v877 = vmul.f32 %v364, %v530
    %v878 = vmul.f32 %v365, %v530
    %v879 = vmul.f32 %v366, %v530
    %v880 = vmul.f32 %v367, %v530
    %v881 = vmul.f32 %v368, %v530
    %v882 = vmul.f32 %v369, %v530
    %v883 = vmul.f32 %v370, %v530
    %v884 = vmul.f32 %v371, %v530
    %v885 = vmul.f32 %v372, %v530
    %v886 = vmul.f32 %v373, %v530
    %v887 = vmul.f32 %v374, %v530
    %v888 = vmul.f32 %v375, %v530
    %v889 = vmul.f32 %v376, %v530
    %v890 = vmul.f32 %v377, %v530
    %v891 = vmul.f32 %v378, %v530
    %v892 = vmul.f32 %v379, %v530
    %v893 = vmul.f32 %v380, %v530
    %v894 = vmul.f32 %v381, %v530
    %v895 = vmul.f32 %v382, %v530
    %v896 = vmul.f32 %v383, %v530
    %v897 = vmul.f32 %v384, %v530
    %v898 = vmul.f32 %v385, %v530
    %v899 = vmul.f32 %v386, %v530
    %v900 = vmul.f32 %v387, %v530
    %v901 = vmul.f32 %v388, %v530
    %v902 = vmul.f32 %v389, %v530
    %v903 = vmul.f32 %v390, %v530
    %v904 = vmul.f32 %v391, %v530
    %v905 = vmul.f32 %v392, %v530
    %v906 = vmul.f32 %v393, %v530
    %v907 = vmul.f32 %v394, %v530
    %v908 = vmul.f32 %v395, %v530
    %v909 = vmul.f32 %v396, %v530
    %v910 = vmul.f32 %v397, %v530
    %v911 = vmul.f32 %v398, %v530
    %v912 = vmul.f32 %v399, %v530
    %v913 = vmul.f32 %v400, %v530
    %v914 = vmul.f32 %v401, %v530
    %v915 = vmul.f32 %v402, %v530
    %v916 = vmul.f32 %v403, %v530
    %v917 = vmul.f32 %v404, %v530
    %v918 = vmul.f32 %v405, %v530
    %v919 = vmul.f32 %v406, %v530
    %v920 = vmul.f32 %v407, %v530
    %v921 = vmul.f32 %v408, %v530
    %v922 = vmul.f32 %v409, %v530
    %v923 = vmul.f32 %v410, %v530
    %v924 = vmul.f32 %v411, %v530
    %v925 = vmul.f32 %v412, %v530
    %v926 = vmul.f32 %v413, %v530
    %v927 = vmul.f32 %v414, %v530
    %v928 = vmul.f32 %v415, %v530
    %v929 = vmul.f32 %v416, %v530
    %v930 = vmul.f32 %v417, %v530
    %v931 = vmul.f32 %v418, %v530
    %v932 = vmul.f32 %v419, %v530
    %v933 = vmul.f32 %v420, %v530
    %v934 = vmul.f32 %v421, %v530
    %v935 = vmul.f32 %v422, %v530
    %v936 = vmul.f32 %v423, %v530
    %v937 = vmul.f32 %v424, %v530
    %v938 = vmul.f32 %v425, %v530
    %v939 = vmul.f32 %v426, %v530
    %v940 = vmul.f32 %v427, %v530
    %v941 = vmul.f32 %v428, %v530
    %v942 = vmul.f32 %v429, %v530
    %v943 = vmul.f32 %v430, %v530
    %v944 = vmul.f32 %v431, %v530
    %v945 = vmul.f32 %v432, %v530
    %v946 = vmul.f32 %v433, %v530
    %v947 = vmul.f32 %v434, %v530
    %v948 = vmul.f32 %v435, %v530
    %v949 = vmul.f32 %v436, %v530
    %v950 = vmul.f32 %v437, %v530
    %v951 = vmul.f32 %v438, %v530
    %v952 = vmul.f32 %v439, %v530
    %v953 = vmul.f32 %v440, %v530
    %v954 = vmul.f32 %v441, %v530
    %v955 = vmul.f32 %v442, %v530
    %v956 = vmul.f32 %v443, %v530
    %v957 = vmul.f32 %v444, %v530
    %v958 = vmul.f32 %v445, %v530
    %v959 = vmul.f32 %v446, %v530
    %v960 = vmul.f32 %v447, %v530
    %v961 = vmul.f32 %v448, %v530
    %v962 = vmul.f32 %v449, %v530
    %v963 = vmul.f32 %v450, %v530
    %v964 = vmul.f32 %v451, %v530
    %v965 = vmul.f32 %v452, %v530
    %v966 = vmul.f32 %v453, %v530
    %v967 = vmul.f32 %v454, %v530
    %v968 = vmul.f32 %v455, %v530
    %v969 = vmul.f32 %v456, %v530
    %v970 = vmul.f32 %v457, %v530
    %v971 = vmul.f32 %v458, %v530
    %v972 = vmul.f32 %v459, %v530
    %v973 = vmul.f32 %v460, %v530
    %v974 = vmul.f32 %v461, %v530
    %v975 = vmul.f32 %v462, %v530
    %v976 = vmul.f32 %v463, %v530
    %v977 = vmul.f32 %v464, %v530
    %v978 = vmul.f32 %v465, %v530
    %v979 = vmul.f32 %v466, %v530
    %v980 = vmul.f32 %v467, %v530
    %v981 = vmul.f32 %v468, %v530
    %v982 = vmul.f32 %v469, %v530
    %v983 = vmul.f32 %v470, %v530
    %v984 = vmul.f32 %v471, %v530
    %v985 = vmul.f32 %v472, %v530
    %v986 = vmul.f32 %v473, %v530
    %v987 = vmul.f32 %v474, %v530
    %v988 = vmul.f32 %v475, %v530
    %v989 = vmul.f32 %v476, %v530
    %v990 = vmul.f32 %v477, %v530
    %v991 = vmul.f32 %v478, %v530
    %v992 = vmul.f32 %v479, %v530
    %v993 = vmul.f32 %v480, %v530
    %v994 = vmul.f32 %v481, %v530
    %v995 = vmul.f32 %v482, %v530
    %v996 = vmul.f32 %v483, %v530
    %v997 = vmul.f32 %v484, %v530
    %v998 = vmul.f32 %v485, %v530
    %v999 = vmul.f32 %v486, %v530
    %v1000 = vmul.f32 %v487, %v530
    %v1001 = vmul.f32 %v488, %v530
    %v1002 = vmul.f32 %v489, %v530
    %v1003 = vmul.f32 %v490, %v530
    %v1004 = vmul.f32 %v491, %v530
    %v1005 = vmul.f32 %v492, %v530
    %v1006 = vmul.f32 %v493, %v530
    %v1007 = vmul.f32 %v494, %v530
    %v1008 = vmul.f32 %v495, %v530
    %v1009 = vmul.f32 %v496, %v530
    %v1010 = vmul.f32 %v497, %v530
    %v1011 = vmul.f32 %v498, %v530
    %v1012 = vmul.f32 %v499, %v530
    %v1013 = vmul.f32 %v500, %v530
    %v1014 = vmul.f32 %v501, %v530
    %v1015 = vmul.f32 %v502, %v530
    %v1016 = vmul.f32 %v503, %v530
    %v1017 = vmul.f32 %v504, %v530
    %v1018 = vmul.f32 %v505, %v530
    %v1019 = vmul.f32 %v506, %v530
    %v1020 = vmul.f32 %v507, %v530
    %v1021 = vmul.f32 %v508, %v530
    %v1022 = vmul.f32 %v509, %v530
    %v1023 = vmul.f32 %v510, %v530
    %v1024 = vmul.f32 %v511, %v530
    %v1025 = vmul.f32 %v512, %v530
    %v1026 = vmul.f32 %v513, %v530
    %v1027 = vmul.f32 %v514, %v530
    %v1028 = vmul.f32 %v515, %v530
    %v1029 = vmul.f32 %v516, %v530
    %v1030 = vmul.f32 %v517, %v530
    %v1031 = vmul.f32 %v518, %v530
    %v1032 = vmul.f32 %v519, %v530
    %v1033 = vmul.f32 %v520, %v530
    %v1034 = vmul.f32 %v521, %v530
    %v1035 = vmul.f32 %v522, %v530
    %v1036 = vmul.f32 %v523, %v530
    %v1037 = vmul.f32 %v524, %v530
    %v1038 = vmul.f32 %v525, %v530
    %v1039 = vmul.f32 %v526, %v530
    %v1040 = vmul.f32 %v527, %v530
    %v1041 = vmul.f32 %v528, %v530
    %v1042 = vmul.f32 %v529, %v530
    %v1043 = vstv %s17
    %v1044 = vadd.f32 %v531, %v1043
    %v1045 = vadd.f32 %v532, %v1043
    %v1046 = vadd.f32 %v533, %v1043
    %v1047 = vadd.f32 %v534, %v1043
    %v1048 = vadd.f32 %v535, %v1043
    %v1049 = vadd.f32 %v536, %v1043
    %v1050 = vadd.f32 %v537, %v1043
    %v1051 = vadd.f32 %v538, %v1043
    %v1052 = vadd.f32 %v539, %v1043
    %v1053 = vadd.f32 %v540, %v1043
    %v1054 = vadd.f32 %v541, %v1043
    %v1055 = vadd.f32 %v542, %v1043
    %v1056 = vadd.f32 %v543, %v1043
    %v1057 = vadd.f32 %v544, %v1043
    %v1058 = vadd.f32 %v545, %v1043
    %v1059 = vadd.f32 %v546, %v1043
    %v1060 = vadd.f32 %v547, %v1043
    %v1061 = vadd.f32 %v548, %v1043
    %v1062 = vadd.f32 %v549, %v1043
    %v1063 = vadd.f32 %v550, %v1043
    %v1064 = vadd.f32 %v551, %v1043
    %v1065 = vadd.f32 %v552, %v1043
    %v1066 = vadd.f32 %v553, %v1043
    %v1067 = vadd.f32 %v554, %v1043
    %v1068 = vadd.f32 %v555, %v1043
    %v1069 = vadd.f32 %v556, %v1043
    %v1070 = vadd.f32 %v557, %v1043
    %v1071 = vadd.f32 %v558, %v1043
    %v1072 = vadd.f32 %v559, %v1043
    %v1073 = vadd.f32 %v560, %v1043
    %v1074 = vadd.f32 %v561, %v1043
    %v1075 = vadd.f32 %v562, %v1043
    %v1076 = vadd.f32 %v563, %v1043
    %v1077 = vadd.f32 %v564, %v1043
    %v1078 = vadd.f32 %v565, %v1043
    %v1079 = vadd.f32 %v566, %v1043
    %v1080 = vadd.f32 %v567, %v1043
    %v1081 = vadd.f32 %v568, %v1043
    %v1082 = vadd.f32 %v569, %v1043
    %v1083 = vadd.f32 %v570, %v1043
    %v1084 = vadd.f32 %v571, %v1043
    %v1085 = vadd.f32 %v572, %v1043
    %v1086 = vadd.f32 %v573, %v1043
    %v1087 = vadd.f32 %v574, %v1043
    %v1088 = vadd.f32 %v575, %v1043
    %v1089 = vadd.f32 %v576, %v1043
    %v1090 = vadd.f32 %v577, %v1043
    %v1091 = vadd.f32 %v578, %v1043
    %v1092 = vadd.f32 %v579, %v1043
    %v1093 = vadd.f32 %v580, %v1043
    %v1094 = vadd.f32 %v581, %v1043
    %v1095 = vadd.f32 %v582, %v1043
    %v1096 = vadd.f32 %v583, %v1043
    %v1097 = vadd.f32 %v584, %v1043
    %v1098 = vadd.f32 %v585, %v1043
    %v1099 = vadd.f32 %v586, %v1043
    %v1100 = vadd.f32 %v587, %v1043
    %v1101 = vadd.f32 %v588, %v1043
    %v1102 = vadd.f32 %v589, %v1043
    %v1103 = vadd.f32 %v590, %v1043
    %v1104 = vadd.f32 %v591, %v1043
    %v1105 = vadd.f32 %v592, %v1043
    %v1106 = vadd.f32 %v593, %v1043
    %v1107 = vadd.f32 %v594, %v1043
    %v1108 = vadd.f32 %v595, %v1043
    %v1109 = vadd.f32 %v596, %v1043
    %v1110 = vadd.f32 %v597, %v1043
    %v1111 = vadd.f32 %v598, %v1043
    %v1112 = vadd.f32 %v599, %v1043
    %v1113 = vadd.f32 %v600, %v1043
    %v1114 = vadd.f32 %v601, %v1043
    %v1115 = vadd.f32 %v602, %v1043
    %v1116 = vadd.f32 %v603, %v1043
    %v1117 = vadd.f32 %v604, %v1043
    %v1118 = vadd.f32 %v605, %v1043
    %v1119 = vadd.f32 %v606, %v1043
    %v1120 = vadd.f32 %v607, %v1043
    %v1121 = vadd.f32 %v608, %v1043
    %v1122 = vadd.f32 %v609, %v1043
    %v1123 = vadd.f32 %v610, %v1043
    %v1124 = vadd.f32 %v611, %v1043
    %v1125 = vadd.f32 %v612, %v1043
    %v1126 = vadd.f32 %v613, %v1043
    %v1127 = vadd.f32 %v614, %v1043
    %v1128 = vadd.f32 %v615, %v1043
    %v1129 = vadd.f32 %v616, %v1043
    %v1130 = vadd.f32 %v617, %v1043
    %v1131 = vadd.f32 %v618, %v1043
    %v1132 = vadd.f32 %v619, %v1043
    %v1133 = vadd.f32 %v620, %v1043
    %v1134 = vadd.f32 %v621, %v1043
    %v1135 = vadd.f32 %v622, %v1043
    %v1136 = vadd.f32 %v623, %v1043
    %v1137 = vadd.f32 %v624, %v1043
    %v1138 = vadd.f32 %v625, %v1043
    %v1139 = vadd.f32 %v626, %v1043
    %v1140 = vadd.f32 %v627, %v1043
    %v1141 = vadd.f32 %v628, %v1043
    %v1142 = vadd.f32 %v629, %v1043
    %v1143 = vadd.f32 %v630, %v1043
    %v1144 = vadd.f32 %v631, %v1043
    %v1145 = vadd.f32 %v632, %v1043
    %v1146 = vadd.f32 %v633, %v1043
    %v1147 = vadd.f32 %v634, %v1043
    %v1148 = vadd.f32 %v635, %v1043
    %v1149 = vadd.f32 %v636, %v1043
    %v1150 = vadd.f32 %v637, %v1043
    %v1151 = vadd.f32 %v638, %v1043
    %v1152 = vadd.f32 %v639, %v1043
    %v1153 = vadd.f32 %v640, %v1043
    %v1154 = vadd.f32 %v641, %v1043
    %v1155 = vadd.f32 %v642, %v1043
    %v1156 = vadd.f32 %v643, %v1043
    %v1157 = vadd.f32 %v644, %v1043
    %v1158 = vadd.f32 %v645, %v1043
    %v1159 = vadd.f32 %v646, %v1043
    %v1160 = vadd.f32 %v647, %v1043
    %v1161 = vadd.f32 %v648, %v1043
    %v1162 = vadd.f32 %v649, %v1043
    %v1163 = vadd.f32 %v650, %v1043
    %v1164 = vadd.f32 %v651, %v1043
    %v1165 = vadd.f32 %v652, %v1043
    %v1166 = vadd.f32 %v653, %v1043
    %v1167 = vadd.f32 %v654, %v1043
    %v1168 = vadd.f32 %v655, %v1043
    %v1169 = vadd.f32 %v656, %v1043
    %v1170 = vadd.f32 %v657, %v1043
    %v1171 = vadd.f32 %v658, %v1043
    %v1172 = vadd.f32 %v659, %v1043
    %v1173 = vadd.f32 %v660, %v1043
    %v1174 = vadd.f32 %v661, %v1043
    %v1175 = vadd.f32 %v662, %v1043
    %v1176 = vadd.f32 %v663, %v1043
    %v1177 = vadd.f32 %v664, %v1043
    %v1178 = vadd.f32 %v665, %v1043
    %v1179 = vadd.f32 %v666, %v1043
    %v1180 = vadd.f32 %v667, %v1043
    %v1181 = vadd.f32 %v668, %v1043
    %v1182 = vadd.f32 %v669, %v1043
    %v1183 = vadd.f32 %v670, %v1043
    %v1184 = vadd.f32 %v671, %v1043
    %v1185 = vadd.f32 %v672, %v1043
    %v1186 = vadd.f32 %v673, %v1043
    %v1187 = vadd.f32 %v674, %v1043
    %v1188 = vadd.f32 %v675, %v1043
    %v1189 = vadd.f32 %v676, %v1043
    %v1190 = vadd.f32 %v677, %v1043
    %v1191 = vadd.f32 %v678, %v1043
    %v1192 = vadd.f32 %v679, %v1043
    %v1193 = vadd.f32 %v680, %v1043
    %v1194 = vadd.f32 %v681, %v1043
    %v1195 = vadd.f32 %v682, %v1043
    %v1196 = vadd.f32 %v683, %v1043
    %v1197 = vadd.f32 %v684, %v1043
    %v1198 = vadd.f32 %v685, %v1043
    %v1199 = vadd.f32 %v686, %v1043
    %v1200 = vadd.f32 %v687, %v1043
    %v1201 = vadd.f32 %v688, %v1043
    %v1202 = vadd.f32 %v689, %v1043
    %v1203 = vadd.f32 %v690, %v1043
    %v1204 = vadd.f32 %v691, %v1043
    %v1205 = vadd.f32 %v692, %v1043
    %v1206 = vadd.f32 %v693, %v1043
    %v1207 = vadd.f32 %v694, %v1043
    %v1208 = vadd.f32 %v695, %v1043
    %v1209 = vadd.f32 %v696, %v1043
    %v1210 = vadd.f32 %v697, %v1043
    %v1211 = vadd.f32 %v698, %v1043
    %v1212 = vadd.f32 %v699, %v1043
    %v1213 = vadd.f32 %v700, %v1043
    %v1214 = vadd.f32 %v701, %v1043
    %v1215 = vadd.f32 %v702, %v1043
    %v1216 = vadd.f32 %v703, %v1043
    %v1217 = vadd.f32 %v704, %v1043
    %v1218 = vadd.f32 %v705, %v1043
    %v1219 = vadd.f32 %v706, %v1043
    %v1220 = vadd.f32 %v707, %v1043
    %v1221 = vadd.f32 %v708, %v1043
    %v1222 = vadd.f32 %v709, %v1043
    %v1223 = vadd.f32 %v710, %v1043
    %v1224 = vadd.f32 %v711, %v1043
    %v1225 = vadd.f32 %v712, %v1043
    %v1226 = vadd.f32 %v713, %v1043
    %v1227 = vadd.f32 %v714, %v1043
    %v1228 = vadd.f32 %v715, %v1043
    %v1229 = vadd.f32 %v716, %v1043
    %v1230 = vadd.f32 %v717, %v1043
    %v1231 = vadd.f32 %v718, %v1043
    %v1232 = vadd.f32 %v719, %v1043
    %v1233 = vadd.f32 %v720, %v1043
    %v1234 = vadd.f32 %v721, %v1043
    %v1235 = vadd.f32 %v722, %v1043
    %v1236 = vadd.f32 %v723, %v1043
    %v1237 = vadd.f32 %v724, %v1043
    %v1238 = vadd.f32 %v725, %v1043
    %v1239 = vadd.f32 %v726, %v1043
    %v1240 = vadd.f32 %v727, %v1043
    %v1241 = vadd.f32 %v728, %v1043
    %v1242 = vadd.f32 %v729, %v1043
    %v1243 = vadd.f32 %v730, %v1043
    %v1244 = vadd.f32 %v731, %v1043
    %v1245 = vadd.f32 %v732, %v1043
    %v1246 = vadd.f32 %v733, %v1043
    %v1247 = vadd.f32 %v734, %v1043
    %v1248 = vadd.f32 %v735, %v1043
    %v1249 = vadd.f32 %v736, %v1043
    %v1250 = vadd.f32 %v737, %v1043
    %v1251 = vadd.f32 %v738, %v1043
    %v1252 = vadd.f32 %v739, %v1043
    %v1253 = vadd.f32 %v740, %v1043
    %v1254 = vadd.f32 %v741, %v1043
    %v1255 = vadd.f32 %v742, %v1043
    %v1256 = vadd.f32 %v743, %v1043
    %v1257 = vadd.f32 %v744, %v1043
    %v1258 = vadd.f32 %v745, %v1043
    %v1259 = vadd.f32 %v746, %v1043
    %v1260 = vadd.f32 %v747, %v1043
    %v1261 = vadd.f32 %v748, %v1043
    %v1262 = vadd.f32 %v749, %v1043
    %v1263 = vadd.f32 %v750, %v1043
    %v1264 = vadd.f32 %v751, %v1043
    %v1265 = vadd.f32 %v752, %v1043
    %v1266 = vadd.f32 %v753, %v1043
    %v1267 = vadd.f32 %v754, %v1043
    %v1268 = vadd.f32 %v755, %v1043
    %v1269 = vadd.f32 %v756, %v1043
    %v1270 = vadd.f32 %v757, %v1043
    %v1271 = vadd.f32 %v758, %v1043
    %v1272 = vadd.f32 %v759, %v1043
    %v1273 = vadd.f32 %v760, %v1043
    %v1274 = vadd.f32 %v761, %v1043
    %v1275 = vadd.f32 %v762, %v1043
    %v1276 = vadd.f32 %v763, %v1043
    %v1277 = vadd.f32 %v764, %v1043
    %v1278 = vadd.f32 %v765, %v1043
    %v1279 = vadd.f32 %v766, %v1043
    %v1280 = vadd.f32 %v767, %v1043
    %v1281 = vadd.f32 %v768, %v1043
    %v1282 = vadd.f32 %v769, %v1043
    %v1283 = vadd.f32 %v770, %v1043
    %v1284 = vadd.f32 %v771, %v1043
    %v1285 = vadd.f32 %v772, %v1043
    %v1286 = vadd.f32 %v773, %v1043
    %v1287 = vadd.f32 %v774, %v1043
    %v1288 = vadd.f32 %v775, %v1043
    %v1289 = vadd.f32 %v776, %v1043
    %v1290 = vadd.f32 %v777, %v1043
    %v1291 = vadd.f32 %v778, %v1043
    %v1292 = vadd.f32 %v779, %v1043
    %v1293 = vadd.f32 %v780, %v1043
    %v1294 = vadd.f32 %v781, %v1043
    %v1295 = vadd.f32 %v782, %v1043
    %v1296 = vadd.f32 %v783, %v1043
    %v1297 = vadd.f32 %v784, %v1043
    %v1298 = vadd.f32 %v785, %v1043
    %v1299 = vadd.f32 %v786, %v1043
    %v1300 = vadd.f32 %v787, %v1043
    %v1301 = vadd.f32 %v788, %v1043
    %v1302 = vadd.f32 %v789, %v1043
    %v1303 = vadd.f32 %v790, %v1043
    %v1304 = vadd.f32 %v791, %v1043
    %v1305 = vadd.f32 %v792, %v1043
    %v1306 = vadd.f32 %v793, %v1043
    %v1307 = vadd.f32 %v794, %v1043
    %v1308 = vadd.f32 %v795, %v1043
    %v1309 = vadd.f32 %v796, %v1043
    %v1310 = vadd.f32 %v797, %v1043
    %v1311 = vadd.f32 %v798, %v1043
    %v1312 = vadd.f32 %v799, %v1043
    %v1313 = vadd.f32 %v800, %v1043
    %v1314 = vadd.f32 %v801, %v1043
    %v1315 = vadd.f32 %v802, %v1043
    %v1316 = vadd.f32 %v803, %v1043
    %v1317 = vadd.f32 %v804, %v1043
    %v1318 = vadd.f32 %v805, %v1043
    %v1319 = vadd.f32 %v806, %v1043
    %v1320 = vadd.f32 %v807, %v1043
    %v1321 = vadd.f32 %v808, %v1043
    %v1322 = vadd.f32 %v809, %v1043
    %v1323 = vadd.f32 %v810, %v1043
    %v1324 = vadd.f32 %v811, %v1043
    %v1325 = vadd.f32 %v812, %v1043
    %v1326 = vadd.f32 %v813, %v1043
    %v1327 = vadd.f32 %v814, %v1043
    %v1328 = vadd.f32 %v815, %v1043
    %v1329 = vadd.f32 %v816, %v1043
    %v1330 = vadd.f32 %v817, %v1043
    %v1331 = vadd.f32 %v818, %v1043
    %v1332 = vadd.f32 %v819, %v1043
    %v1333 = vadd.f32 %v820, %v1043
    %v1334 = vadd.f32 %v821, %v1043
    %v1335 = vadd.f32 %v822, %v1043
    %v1336 = vadd.f32 %v823, %v1043
    %v1337 = vadd.f32 %v824, %v1043
    %v1338 = vadd.f32 %v825, %v1043
    %v1339 = vadd.f32 %v826, %v1043
    %v1340 = vadd.f32 %v827, %v1043
    %v1341 = vadd.f32 %v828, %v1043
    %v1342 = vadd.f32 %v829, %v1043
    %v1343 = vadd.f32 %v830, %v1043
    %v1344 = vadd.f32 %v831, %v1043
    %v1345 = vadd.f32 %v832, %v1043
    %v1346 = vadd.f32 %v833, %v1043
    %v1347 = vadd.f32 %v834, %v1043
    %v1348 = vadd.f32 %v835, %v1043
    %v1349 = vadd.f32 %v836, %v1043
    %v1350 = vadd.f32 %v837, %v1043
    %v1351 = vadd.f32 %v838, %v1043
    %v1352 = vadd.f32 %v839, %v1043
    %v1353 = vadd.f32 %v840, %v1043
    %v1354 = vadd.f32 %v841, %v1043
    %v1355 = vadd.f32 %v842, %v1043
    %v1356 = vadd.f32 %v843, %v1043
    %v1357 = vadd.f32 %v844, %v1043
    %v1358 = vadd.f32 %v845, %v1043
    %v1359 = vadd.f32 %v846, %v1043
    %v1360 = vadd.f32 %v847, %v1043
    %v1361 = vadd.f32 %v848, %v1043
    %v1362 = vadd.f32 %v849, %v1043
    %v1363 = vadd.f32 %v850, %v1043
    %v1364 = vadd.f32 %v851, %v1043
    %v1365 = vadd.f32 %v852, %v1043
    %v1366 = vadd.f32 %v853, %v1043
    %v1367 = vadd.f32 %v854, %v1043
    %v1368 = vadd.f32 %v855, %v1043
    %v1369 = vadd.f32 %v856, %v1043
    %v1370 = vadd.f32 %v857, %v1043
    %v1371 = vadd.f32 %v858, %v1043
    %v1372 = vadd.f32 %v859, %v1043
    %v1373 = vadd.f32 %v860, %v1043
    %v1374 = vadd.f32 %v861, %v1043
    %v1375 = vadd.f32 %v862, %v1043
    %v1376 = vadd.f32 %v863, %v1043
    %v1377 = vadd.f32 %v864, %v1043
    %v1378 = vadd.f32 %v865, %v1043
    %v1379 = vadd.f32 %v866, %v1043
    %v1380 = vadd.f32 %v867, %v1043
    %v1381 = vadd.f32 %v868, %v1043
    %v1382 = vadd.f32 %v869, %v1043
    %v1383 = vadd.f32 %v870, %v1043
    %v1384 = vadd.f32 %v871, %v1043
    %v1385 = vadd.f32 %v872, %v1043
    %v1386 = vadd.f32 %v873, %v1043
    %v1387 = vadd.f32 %v874, %v1043
    %v1388 = vadd.f32 %v875, %v1043
    %v1389 = vadd.f32 %v876, %v1043
    %v1390 = vadd.f32 %v877, %v1043
    %v1391 = vadd.f32 %v878, %v1043
    %v1392 = vadd.f32 %v879, %v1043
    %v1393 = vadd.f32 %v880, %v1043
    %v1394 = vadd.f32 %v881, %v1043
    %v1395 = vadd.f32 %v882, %v1043
    %v1396 = vadd.f32 %v883, %v1043
    %v1397 = vadd.f32 %v884, %v1043
    %v1398 = vadd.f32 %v885, %v1043
    %v1399 = vadd.f32 %v886, %v1043
    %v1400 = vadd.f32 %v887, %v1043
    %v1401 = vadd.f32 %v888, %v1043
    %v1402 = vadd.f32 %v889, %v1043
    %v1403 = vadd.f32 %v890, %v1043
    %v1404 = vadd.f32 %v891, %v1043
    %v1405 = vadd.f32 %v892, %v1043
    %v1406 = vadd.f32 %v893, %v1043
    %v1407 = vadd.f32 %v894, %v1043
    %v1408 = vadd.f32 %v895, %v1043
    %v1409 = vadd.f32 %v896, %v1043
    %v1410 = vadd.f32 %v897, %v1043
    %v1411 = vadd.f32 %v898, %v1043
    %v1412 = vadd.f32 %v899, %v1043
    %v1413 = vadd.f32 %v900, %v1043
    %v1414 = vadd.f32 %v901, %v1043
    %v1415 = vadd.f32 %v902, %v1043
    %v1416 = vadd.f32 %v903, %v1043
    %v1417 = vadd.f32 %v904, %v1043
    %v1418 = vadd.f32 %v905, %v1043
    %v1419 = vadd.f32 %v906, %v1043
    %v1420 = vadd.f32 %v907, %v1043
    %v1421 = vadd.f32 %v908, %v1043
    %v1422 = vadd.f32 %v909, %v1043
    %v1423 = vadd.f32 %v910, %v1043
    %v1424 = vadd.f32 %v911, %v1043
    %v1425 = vadd.f32 %v912, %v1043
    %v1426 = vadd.f32 %v913, %v1043
    %v1427 = vadd.f32 %v914, %v1043
    %v1428 = vadd.f32 %v915, %v1043
    %v1429 = vadd.f32 %v916, %v1043
    %v1430 = vadd.f32 %v917, %v1043
    %v1431 = vadd.f32 %v918, %v1043
    %v1432 = vadd.f32 %v919, %v1043
    %v1433 = vadd.f32 %v920, %v1043
    %v1434 = vadd.f32 %v921, %v1043
    %v1435 = vadd.f32 %v922, %v1043
    %v1436 = vadd.f32 %v923, %v1043
    %v1437 = vadd.f32 %v924, %v1043
    %v1438 = vadd.f32 %v925, %v1043
    %v1439 = vadd.f32 %v926, %v1043
    %v1440 = vadd.f32 %v927, %v1043
    %v1441 = vadd.f32 %v928, %v1043
    %v1442 = vadd.f32 %v929, %v1043
    %v1443 = vadd.f32 %v930, %v1043
    %v1444 = vadd.f32 %v931, %v1043
    %v1445 = vadd.f32 %v932, %v1043
    %v1446 = vadd.f32 %v933, %v1043
    %v1447 = vadd.f32 %v934, %v1043
    %v1448 = vadd.f32 %v935, %v1043
    %v1449 = vadd.f32 %v936, %v1043
    %v1450 = vadd.f32 %v937, %v1043
    %v1451 = vadd.f32 %v938, %v1043
    %v1452 = vadd.f32 %v939, %v1043
    %v1453 = vadd.f32 %v940, %v1043
    %v1454 = vadd.f32 %v941, %v1043
    %v1455 = vadd.f32 %v942, %v1043
    %v1456 = vadd.f32 %v943, %v1043
    %v1457 = vadd.f32 %v944, %v1043
    %v1458 = vadd.f32 %v945, %v1043
    %v1459 = vadd.f32 %v946, %v1043
    %v1460 = vadd.f32 %v947, %v1043
    %v1461 = vadd.f32 %v948, %v1043
    %v1462 = vadd.f32 %v949, %v1043
    %v1463 = vadd.f32 %v950, %v1043
    %v1464 = vadd.f32 %v951, %v1043
    %v1465 = vadd.f32 %v952, %v1043
    %v1466 = vadd.f32 %v953, %v1043
    %v1467 = vadd.f32 %v954, %v1043
    %v1468 = vadd.f32 %v955, %v1043
    %v1469 = vadd.f32 %v956, %v1043
    %v1470 = vadd.f32 %v957, %v1043
    %v1471 = vadd.f32 %v958, %v1043
    %v1472 = vadd.f32 %v959, %v1043
    %v1473 = vadd.f32 %v960, %v1043
    %v1474 = vadd.f32 %v961, %v1043
    %v1475 = vadd.f32 %v962, %v1043
    %v1476 = vadd.f32 %v963, %v1043
    %v1477 = vadd.f32 %v964, %v1043
    %v1478 = vadd.f32 %v965, %v1043
    %v1479 = vadd.f32 %v966, %v1043
    %v1480 = vadd.f32 %v967, %v1043
    %v1481 = vadd.f32 %v968, %v1043
    %v1482 = vadd.f32 %v969, %v1043
    %v1483 = vadd.f32 %v970, %v1043
    %v1484 = vadd.f32 %v971, %v1043
    %v1485 = vadd.f32 %v972, %v1043
    %v1486 = vadd.f32 %v973, %v1043
    %v1487 = vadd.f32 %v974, %v1043
    %v1488 = vadd.f32 %v975, %v1043
    %v1489 = vadd.f32 %v976, %v1043
    %v1490 = vadd.f32 %v977, %v1043
    %v1491 = vadd.f32 %v978, %v1043
    %v1492 = vadd.f32 %v979, %v1043
    %v1493 = vadd.f32 %v980, %v1043
    %v1494 = vadd.f32 %v981, %v1043
    %v1495 = vadd.f32 %v982, %v1043
    %v1496 = vadd.f32 %v983, %v1043
    %v1497 = vadd.f32 %v984, %v1043
    %v1498 = vadd.f32 %v985, %v1043
    %v1499 = vadd.f32 %v986, %v1043
    %v1500 = vadd.f32 %v987, %v1043
    %v1501 = vadd.f32 %v988, %v1043
    %v1502 = vadd.f32 %v989, %v1043
    %v1503 = vadd.f32 %v990, %v1043
    %v1504 = vadd.f32 %v991, %v1043
    %v1505 = vadd.f32 %v992, %v1043
    %v1506 = vadd.f32 %v993, %v1043
    %v1507 = vadd.f32 %v994, %v1043
    %v1508 = vadd.f32 %v995, %v1043
    %v1509 = vadd.f32 %v996, %v1043
    %v1510 = vadd.f32 %v997, %v1043
    %v1511 = vadd.f32 %v998, %v1043
    %v1512 = vadd.f32 %v999, %v1043
    %v1513 = vadd.f32 %v1000, %v1043
    %v1514 = vadd.f32 %v1001, %v1043
    %v1515 = vadd.f32 %v1002, %v1043
    %v1516 = vadd.f32 %v1003, %v1043
    %v1517 = vadd.f32 %v1004, %v1043
    %v1518 = vadd.f32 %v1005, %v1043
    %v1519 = vadd.f32 %v1006, %v1043
    %v1520 = vadd.f32 %v1007, %v1043
    %v1521 = vadd.f32 %v1008, %v1043
    %v1522 = vadd.f32 %v1009, %v1043
    %v1523 = vadd.f32 %v1010, %v1043
    %v1524 = vadd.f32 %v1011, %v1043
    %v1525 = vadd.f32 %v1012, %v1043
    %v1526 = vadd.f32 %v1013, %v1043
    %v1527 = vadd.f32 %v1014, %v1043
    %v1528 = vadd.f32 %v1015, %v1043
    %v1529 = vadd.f32 %v1016, %v1043
    %v1530 = vadd.f32 %v1017, %v1043
    %v1531 = vadd.f32 %v1018, %v1043
    %v1532 = vadd.f32 %v1019, %v1043
    %v1533 = vadd.f32 %v1020, %v1043
    %v1534 = vadd.f32 %v1021, %v1043
    %v1535 = vadd.f32 %v1022, %v1043
    %v1536 = vadd.f32 %v1023, %v1043
    %v1537 = vadd.f32 %v1024, %v1043
    %v1538 = vadd.f32 %v1025, %v1043
    %v1539 = vadd.f32 %v1026, %v1043
    %v1540 = vadd.f32 %v1027, %v1043
    %v1541 = vadd.f32 %v1028, %v1043
    %v1542 = vadd.f32 %v1029, %v1043
    %v1543 = vadd.f32 %v1030, %v1043
    %v1544 = vadd.f32 %v1031, %v1043
    %v1545 = vadd.f32 %v1032, %v1043
    %v1546 = vadd.f32 %v1033, %v1043
    %v1547 = vadd.f32 %v1034, %v1043
    %v1548 = vadd.f32 %v1035, %v1043
    %v1549 = vadd.f32 %v1036, %v1043
    %v1550 = vadd.f32 %v1037, %v1043
    %v1551 = vadd.f32 %v1038, %v1043
    %v1552 = vadd.f32 %v1039, %v1043
    %v1553 = vadd.f32 %v1040, %v1043
    %v1554 = vadd.f32 %v1041, %v1043
    %v1555 = vadd.f32 %v1042, %v1043
    %1556 = vst [vmem:[#allocation4] sm:$0xff] %v1044
    %1557 = vst [vmem:[#allocation4 + $0x8] sm:$0xff] %v1045
    %1558 = vst [vmem:[#allocation4 + $0x10] sm:$0xff] %v1046
    %1559 = vst [vmem:[#allocation4 + $0x18] sm:$0xff] %v1047
    %1560 = vst [vmem:[#allocation4 + $0x20] sm:$0xff] %v1048
    %1561 = vst [vmem:[#allocation4 + $0x28] sm:$0xff] %v1049
    %1562 = vst [vmem:[#allocation4 + $0x30] sm:$0xff] %v1050
    %1563 = vst [vmem:[#allocation4 + $0x38] sm:$0xff] %v1051
    %1564 = vst [vmem:[#allocation4 + $0x40] sm:$0xff] %v1052
    %1565 = vst [vmem:[#allocation4 + $0x48] sm:$0xff] %v1053
    %1566 = vst [vmem:[#allocation4 + $0x50] sm:$0xff] %v1054
    %1567 = vst [vmem:[#allocation4 + $0x58] sm:$0xff] %v1055
    %1568 = vst [vmem:[#allocation4 + $0x60] sm:$0xff] %v1056
    %1569 = vst [vmem:[#allocation4 + $0x68] sm:$0xff] %v1057
    %1570 = vst [vmem:[#allocation4 + $0x70] sm:$0xff] %v1058
    %1571 = vst [vmem:[#allocation4 + $0x78] sm:$0xff] %v1059
    %1572 = vst [vmem:[#allocation4 + $0x80] sm:$0xff] %v1060
    %1573 = vst [vmem:[#allocation4 + $0x88] sm:$0xff] %v1061
    %1574 = vst [vmem:[#allocation4 + $0x90] sm:$0xff] %v1062
    %1575 = vst [vmem:[#allocation4 + $0x98] sm:$0xff] %v1063
    %1576 = vst [vmem:[#allocation4 + $0xa0] sm:$0xff] %v1064
    %1577 = vst [vmem:[#allocation4 + $0xa8] sm:$0xff] %v1065
    %1578 = vst [vmem:[#allocation4 + $0xb0] sm:$0xff] %v1066
    %1579 = vst [vmem:[#allocation4 + $0xb8] sm:$0xff] %v1067
    %1580 = vst [vmem:[#allocation4 + $0xc0] sm:$0xff] %v1068
    %1581 = vst [vmem:[#allocation4 + $0xc8] sm:$0xff] %v1069
    %1582 = vst [vmem:[#allocation4 + $0xd0] sm:$0xff] %v1070
    %1583 = vst [vmem:[#allocation4 + $0xd8] sm:$0xff] %v1071
    %1584 = vst [vmem:[#allocation4 + $0xe0] sm:$0xff] %v1072
    %1585 = vst [vmem:[#allocation4 + $0xe8] sm:$0xff] %v1073
    %1586 = vst [vmem:[#allocation4 + $0xf0] sm:$0xff] %v1074
    %1587 = vst [vmem:[#allocation4 + $0xf8] sm:$0xff] %v1075
    %1588 = vst [vmem:[#allocation4 + $0x100] sm:$0xff] %v1076
    %1589 = vst [vmem:[#allocation4 + $0x108] sm:$0xff] %v1077
    %1590 = vst [vmem:[#allocation4 + $0x110] sm:$0xff] %v1078
    %1591 = vst [vmem:[#allocation4 + $0x118] sm:$0xff] %v1079
    %1592 = vst [vmem:[#allocation4 + $0x120] sm:$0xff] %v1080
    %1593 = vst [vmem:[#allocation4 + $0x128] sm:$0xff] %v1081
    %1594 = vst [vmem:[#allocation4 + $0x130] sm:$0xff] %v1082
    %1595 = vst [vmem:[#allocation4 + $0x138] sm:$0xff] %v1083
    %1596 = vst [vmem:[#allocation4 + $0x140] sm:$0xff] %v1084
    %1597 = vst [vmem:[#allocation4 + $0x148] sm:$0xff] %v1085
    %1598 = vst [vmem:[#allocation4 + $0x150] sm:$0xff] %v1086
    %1599 = vst [vmem:[#allocation4 + $0x158] sm:$0xff] %v1087
    %1600 = vst [vmem:[#allocation4 + $0x160] sm:$0xff] %v1088
    %1601 = vst [vmem:[#allocation4 + $0x168] sm:$0xff] %v1089
    %1602 = vst [vmem:[#allocation4 + $0x170] sm:$0xff] %v1090
    %1603 = vst [vmem:[#allocation4 + $0x178] sm:$0xff] %v1091
    %1604 = vst [vmem:[#allocation4 + $0x180] sm:$0xff] %v1092
    %1605 = vst [vmem:[#allocation4 + $0x188] sm:$0xff] %v1093
    %1606 = vst [vmem:[#allocation4 + $0x190] sm:$0xff] %v1094
    %1607 = vst [vmem:[#allocation4 + $0x198] sm:$0xff] %v1095
    %1608 = vst [vmem:[#allocation4 + $0x1a0] sm:$0xff] %v1096
    %1609 = vst [vmem:[#allocation4 + $0x1a8] sm:$0xff] %v1097
    %1610 = vst [vmem:[#allocation4 + $0x1b0] sm:$0xff] %v1098
    %1611 = vst [vmem:[#allocation4 + $0x1b8] sm:$0xff] %v1099
    %1612 = vst [vmem:[#allocation4 + $0x1c0] sm:$0xff] %v1100
    %1613 = vst [vmem:[#allocation4 + $0x1c8] sm:$0xff] %v1101
    %1614 = vst [vmem:[#allocation4 + $0x1d0] sm:$0xff] %v1102
    %1615 = vst [vmem:[#allocation4 + $0x1d8] sm:$0xff] %v1103
    %1616 = vst [vmem:[#allocation4 + $0x1e0] sm:$0xff] %v1104
    %1617 = vst [vmem:[#allocation4 + $0x1e8] sm:$0xff] %v1105
    %1618 = vst [vmem:[#allocation4 + $0x1f0] sm:$0xff] %v1106
    %1619 = vst [vmem:[#allocation4 + $0x1f8] sm:$0xff] %v1107
    %1620 = vst [vmem:[#allocation4 + $0x200] sm:$0xff] %v1108
    %1621 = vst [vmem:[#allocation4 + $0x208] sm:$0xff] %v1109
    %1622 = vst [vmem:[#allocation4 + $0x210] sm:$0xff] %v1110
    %1623 = vst [vmem:[#allocation4 + $0x218] sm:$0xff] %v1111
    %1624 = vst [vmem:[#allocation4 + $0x220] sm:$0xff] %v1112
    %1625 = vst [vmem:[#allocation4 + $0x228] sm:$0xff] %v1113
    %1626 = vst [vmem:[#allocation4 + $0x230] sm:$0xff] %v1114
    %1627 = vst [vmem:[#allocation4 + $0x238] sm:$0xff] %v1115
    %1628 = vst [vmem:[#allocation4 + $0x240] sm:$0xff] %v1116
    %1629 = vst [vmem:[#allocation4 + $0x248] sm:$0xff] %v1117
    %1630 = vst [vmem:[#allocation4 + $0x250] sm:$0xff] %v1118
    %1631 = vst [vmem:[#allocation4 + $0x258] sm:$0xff] %v1119
    %1632 = vst [vmem:[#allocation4 + $0x260] sm:$0xff] %v1120
    %1633 = vst [vmem:[#allocation4 + $0x268] sm:$0xff] %v1121
    %1634 = vst [vmem:[#allocation4 + $0x270] sm:$0xff] %v1122
    %1635 = vst [vmem:[#allocation4 + $0x278] sm:$0xff] %v1123
    %1636 = vst [vmem:[#allocation4 + $0x280] sm:$0xff] %v1124
    %1637 = vst [vmem:[#allocation4 + $0x288] sm:$0xff] %v1125
    %1638 = vst [vmem:[#allocation4 + $0x290] sm:$0xff] %v1126
    %1639 = vst [vmem:[#allocation4 + $0x298] sm:$0xff] %v1127
    %1640 = vst [vmem:[#allocation4 + $0x2a0] sm:$0xff] %v1128
    %1641 = vst [vmem:[#allocation4 + $0x2a8] sm:$0xff] %v1129
    %1642 = vst [vmem:[#allocation4 + $0x2b0] sm:$0xff] %v1130
    %1643 = vst [vmem:[#allocation4 + $0x2b8] sm:$0xff] %v1131
    %1644 = vst [vmem:[#allocation4 + $0x2c0] sm:$0xff] %v1132
    %1645 = vst [vmem:[#allocation4 + $0x2c8] sm:$0xff] %v1133
    %1646 = vst [vmem:[#allocation4 + $0x2d0] sm:$0xff] %v1134
    %1647 = vst [vmem:[#allocation4 + $0x2d8] sm:$0xff] %v1135
    %1648 = vst [vmem:[#allocation4 + $0x2e0] sm:$0xff] %v1136
    %1649 = vst [vmem:[#allocation4 + $0x2e8] sm:$0xff] %v1137
    %1650 = vst [vmem:[#allocation4 + $0x2f0] sm:$0xff] %v1138
    %1651 = vst [vmem:[#allocation4 + $0x2f8] sm:$0xff] %v1139
    %1652 = vst [vmem:[#allocation4 + $0x300] sm:$0xff] %v1140
    %1653 = vst [vmem:[#allocation4 + $0x308] sm:$0xff] %v1141
    %1654 = vst [vmem:[#allocation4 + $0x310] sm:$0xff] %v1142
    %1655 = vst [vmem:[#allocation4 + $0x318] sm:$0xff] %v1143
    %1656 = vst [vmem:[#allocation4 + $0x320] sm:$0xff] %v1144
    %1657 = vst [vmem:[#allocation4 + $0x328] sm:$0xff] %v1145
    %1658 = vst [vmem:[#allocation4 + $0x330] sm:$0xff] %v1146
    %1659 = vst [vmem:[#allocation4 + $0x338] sm:$0xff] %v1147
    %1660 = vst [vmem:[#allocation4 + $0x340] sm:$0xff] %v1148
    %1661 = vst [vmem:[#allocation4 + $0x348] sm:$0xff] %v1149
    %1662 = vst [vmem:[#allocation4 + $0x350] sm:$0xff] %v1150
    %1663 = vst [vmem:[#allocation4 + $0x358] sm:$0xff] %v1151
    %1664 = vst [vmem:[#allocation4 + $0x360] sm:$0xff] %v1152
    %1665 = vst [vmem:[#allocation4 + $0x368] sm:$0xff] %v1153
    %1666 = vst [vmem:[#allocation4 + $0x370] sm:$0xff] %v1154
    %1667 = vst [vmem:[#allocation4 + $0x378] sm:$0xff] %v1155
    %1668 = vst [vmem:[#allocation4 + $0x380] sm:$0xff] %v1156
    %1669 = vst [vmem:[#allocation4 + $0x388] sm:$0xff] %v1157
    %1670 = vst [vmem:[#allocation4 + $0x390] sm:$0xff] %v1158
    %1671 = vst [vmem:[#allocation4 + $0x398] sm:$0xff] %v1159
    %1672 = vst [vmem:[#allocation4 + $0x3a0] sm:$0xff] %v1160
    %1673 = vst [vmem:[#allocation4 + $0x3a8] sm:$0xff] %v1161
    %1674 = vst [vmem:[#allocation4 + $0x3b0] sm:$0xff] %v1162
    %1675 = vst [vmem:[#allocation4 + $0x3b8] sm:$0xff] %v1163
    %1676 = vst [vmem:[#allocation4 + $0x3c0] sm:$0xff] %v1164
    %1677 = vst [vmem:[#allocation4 + $0x3c8] sm:$0xff] %v1165
    %1678 = vst [vmem:[#allocation4 + $0x3d0] sm:$0xff] %v1166
    %1679 = vst [vmem:[#allocation4 + $0x3d8] sm:$0xff] %v1167
    %1680 = vst [vmem:[#allocation4 + $0x3e0] sm:$0xff] %v1168
    %1681 = vst [vmem:[#allocation4 + $0x3e8] sm:$0xff] %v1169
    %1682 = vst [vmem:[#allocation4 + $0x3f0] sm:$0xff] %v1170
    %1683 = vst [vmem:[#allocation4 + $0x3f8] sm:$0xff] %v1171
    %1684 = vst [vmem:[#allocation4 + $0x400] sm:$0xff] %v1172
    %1685 = vst [vmem:[#allocation4 + $0x408] sm:$0xff] %v1173
    %1686 = vst [vmem:[#allocation4 + $0x410] sm:$0xff] %v1174
    %1687 = vst [vmem:[#allocation4 + $0x418] sm:$0xff] %v1175
    %1688 = vst [vmem:[#allocation4 + $0x420] sm:$0xff] %v1176
    %1689 = vst [vmem:[#allocation4 + $0x428] sm:$0xff] %v1177
    %1690 = vst [vmem:[#allocation4 + $0x430] sm:$0xff] %v1178
    %1691 = vst [vmem:[#allocation4 + $0x438] sm:$0xff] %v1179
    %1692 = vst [vmem:[#allocation4 + $0x440] sm:$0xff] %v1180
    %1693 = vst [vmem:[#allocation4 + $0x448] sm:$0xff] %v1181
    %1694 = vst [vmem:[#allocation4 + $0x450] sm:$0xff] %v1182
    %1695 = vst [vmem:[#allocation4 + $0x458] sm:$0xff] %v1183
    %1696 = vst [vmem:[#allocation4 + $0x460] sm:$0xff] %v1184
    %1697 = vst [vmem:[#allocation4 + $0x468] sm:$0xff] %v1185
    %1698 = vst [vmem:[#allocation4 + $0x470] sm:$0xff] %v1186
    %1699 = vst [vmem:[#allocation4 + $0x478] sm:$0xff] %v1187
    %1700 = vst [vmem:[#allocation4 + $0x480] sm:$0xff] %v1188
    %1701 = vst [vmem:[#allocation4 + $0x488] sm:$0xff] %v1189
    %1702 = vst [vmem:[#allocation4 + $0x490] sm:$0xff] %v1190
    %1703 = vst [vmem:[#allocation4 + $0x498] sm:$0xff] %v1191
    %1704 = vst [vmem:[#allocation4 + $0x4a0] sm:$0xff] %v1192
    %1705 = vst [vmem:[#allocation4 + $0x4a8] sm:$0xff] %v1193
    %1706 = vst [vmem:[#allocation4 + $0x4b0] sm:$0xff] %v1194
    %1707 = vst [vmem:[#allocation4 + $0x4b8] sm:$0xff] %v1195
    %1708 = vst [vmem:[#allocation4 + $0x4c0] sm:$0xff] %v1196
    %1709 = vst [vmem:[#allocation4 + $0x4c8] sm:$0xff] %v1197
    %1710 = vst [vmem:[#allocation4 + $0x4d0] sm:$0xff] %v1198
    %1711 = vst [vmem:[#allocation4 + $0x4d8] sm:$0xff] %v1199
    %1712 = vst [vmem:[#allocation4 + $0x4e0] sm:$0xff] %v1200
    %1713 = vst [vmem:[#allocation4 + $0x4e8] sm:$0xff] %v1201
    %1714 = vst [vmem:[#allocation4 + $0x4f0] sm:$0xff] %v1202
    %1715 = vst [vmem:[#allocation4 + $0x4f8] sm:$0xff] %v1203
    %1716 = vst [vmem:[#allocation4 + $0x500] sm:$0xff] %v1204
    %1717 = vst [vmem:[#allocation4 + $0x508] sm:$0xff] %v1205
    %1718 = vst [vmem:[#allocation4 + $0x510] sm:$0xff] %v1206
    %1719 = vst [vmem:[#allocation4 + $0x518] sm:$0xff] %v1207
    %1720 = vst [vmem:[#allocation4 + $0x520] sm:$0xff] %v1208
    %1721 = vst [vmem:[#allocation4 + $0x528] sm:$0xff] %v1209
    %1722 = vst [vmem:[#allocation4 + $0x530] sm:$0xff] %v1210
    %1723 = vst [vmem:[#allocation4 + $0x538] sm:$0xff] %v1211
    %1724 = vst [vmem:[#allocation4 + $0x540] sm:$0xff] %v1212
    %1725 = vst [vmem:[#allocation4 + $0x548] sm:$0xff] %v1213
    %1726 = vst [vmem:[#allocation4 + $0x550] sm:$0xff] %v1214
    %1727 = vst [vmem:[#allocation4 + $0x558] sm:$0xff] %v1215
    %1728 = vst [vmem:[#allocation4 + $0x560] sm:$0xff] %v1216
    %1729 = vst [vmem:[#allocation4 + $0x568] sm:$0xff] %v1217
    %1730 = vst [vmem:[#allocation4 + $0x570] sm:$0xff] %v1218
    %1731 = vst [vmem:[#allocation4 + $0x578] sm:$0xff] %v1219
    %1732 = vst [vmem:[#allocation4 + $0x580] sm:$0xff] %v1220
    %1733 = vst [vmem:[#allocation4 + $0x588] sm:$0xff] %v1221
    %1734 = vst [vmem:[#allocation4 + $0x590] sm:$0xff] %v1222
    %1735 = vst [vmem:[#allocation4 + $0x598] sm:$0xff] %v1223
    %1736 = vst [vmem:[#allocation4 + $0x5a0] sm:$0xff] %v1224
    %1737 = vst [vmem:[#allocation4 + $0x5a8] sm:$0xff] %v1225
    %1738 = vst [vmem:[#allocation4 + $0x5b0] sm:$0xff] %v1226
    %1739 = vst [vmem:[#allocation4 + $0x5b8] sm:$0xff] %v1227
    %1740 = vst [vmem:[#allocation4 + $0x5c0] sm:$0xff] %v1228
    %1741 = vst [vmem:[#allocation4 + $0x5c8] sm:$0xff] %v1229
    %1742 = vst [vmem:[#allocation4 + $0x5d0] sm:$0xff] %v1230
    %1743 = vst [vmem:[#allocation4 + $0x5d8] sm:$0xff] %v1231
    %1744 = vst [vmem:[#allocation4 + $0x5e0] sm:$0xff] %v1232
    %1745 = vst [vmem:[#allocation4 + $0x5e8] sm:$0xff] %v1233
    %1746 = vst [vmem:[#allocation4 + $0x5f0] sm:$0xff] %v1234
    %1747 = vst [vmem:[#allocation4 + $0x5f8] sm:$0xff] %v1235
    %1748 = vst [vmem:[#allocation4 + $0x600] sm:$0xff] %v1236
    %1749 = vst [vmem:[#allocation4 + $0x608] sm:$0xff] %v1237
    %1750 = vst [vmem:[#allocation4 + $0x610] sm:$0xff] %v1238
    %1751 = vst [vmem:[#allocation4 + $0x618] sm:$0xff] %v1239
    %1752 = vst [vmem:[#allocation4 + $0x620] sm:$0xff] %v1240
    %1753 = vst [vmem:[#allocation4 + $0x628] sm:$0xff] %v1241
    %1754 = vst [vmem:[#allocation4 + $0x630] sm:$0xff] %v1242
    %1755 = vst [vmem:[#allocation4 + $0x638] sm:$0xff] %v1243
    %1756 = vst [vmem:[#allocation4 + $0x640] sm:$0xff] %v1244
    %1757 = vst [vmem:[#allocation4 + $0x648] sm:$0xff] %v1245
    %1758 = vst [vmem:[#allocation4 + $0x650] sm:$0xff] %v1246
    %1759 = vst [vmem:[#allocation4 + $0x658] sm:$0xff] %v1247
    %1760 = vst [vmem:[#allocation4 + $0x660] sm:$0xff] %v1248
    %1761 = vst [vmem:[#allocation4 + $0x668] sm:$0xff] %v1249
    %1762 = vst [vmem:[#allocation4 + $0x670] sm:$0xff] %v1250
    %1763 = vst [vmem:[#allocation4 + $0x678] sm:$0xff] %v1251
    %1764 = vst [vmem:[#allocation4 + $0x680] sm:$0xff] %v1252
    %1765 = vst [vmem:[#allocation4 + $0x688] sm:$0xff] %v1253
    %1766 = vst [vmem:[#allocation4 + $0x690] sm:$0xff] %v1254
    %1767 = vst [vmem:[#allocation4 + $0x698] sm:$0xff] %v1255
    %1768 = vst [vmem:[#allocation4 + $0x6a0] sm:$0xff] %v1256
    %1769 = vst [vmem:[#allocation4 + $0x6a8] sm:$0xff] %v1257
    %1770 = vst [vmem:[#allocation4 + $0x6b0] sm:$0xff] %v1258
    %1771 = vst [vmem:[#allocation4 + $0x6b8] sm:$0xff] %v1259
    %1772 = vst [vmem:[#allocation4 + $0x6c0] sm:$0xff] %v1260
    %1773 = vst [vmem:[#allocation4 + $0x6c8] sm:$0xff] %v1261
    %1774 = vst [vmem:[#allocation4 + $0x6d0] sm:$0xff] %v1262
    %1775 = vst [vmem:[#allocation4 + $0x6d8] sm:$0xff] %v1263
    %1776 = vst [vmem:[#allocation4 + $0x6e0] sm:$0xff] %v1264
    %1777 = vst [vmem:[#allocation4 + $0x6e8] sm:$0xff] %v1265
    %1778 = vst [vmem:[#allocation4 + $0x6f0] sm:$0xff] %v1266
    %1779 = vst [vmem:[#allocation4 + $0x6f8] sm:$0xff] %v1267
    %1780 = vst [vmem:[#allocation4 + $0x700] sm:$0xff] %v1268
    %1781 = vst [vmem:[#allocation4 + $0x708] sm:$0xff] %v1269
    %1782 = vst [vmem:[#allocation4 + $0x710] sm:$0xff] %v1270
    %1783 = vst [vmem:[#allocation4 + $0x718] sm:$0xff] %v1271
    %1784 = vst [vmem:[#allocation4 + $0x720] sm:$0xff] %v1272
    %1785 = vst [vmem:[#allocation4 + $0x728] sm:$0xff] %v1273
    %1786 = vst [vmem:[#allocation4 + $0x730] sm:$0xff] %v1274
    %1787 = vst [vmem:[#allocation4 + $0x738] sm:$0xff] %v1275
    %1788 = vst [vmem:[#allocation4 + $0x740] sm:$0xff] %v1276
    %1789 = vst [vmem:[#allocation4 + $0x748] sm:$0xff] %v1277
    %1790 = vst [vmem:[#allocation4 + $0x750] sm:$0xff] %v1278
    %1791 = vst [vmem:[#allocation4 + $0x758] sm:$0xff] %v1279
    %1792 = vst [vmem:[#allocation4 + $0x760] sm:$0xff] %v1280
    %1793 = vst [vmem:[#allocation4 + $0x768] sm:$0xff] %v1281
    %1794 = vst [vmem:[#allocation4 + $0x770] sm:$0xff] %v1282
    %1795 = vst [vmem:[#allocation4 + $0x778] sm:$0xff] %v1283
    %1796 = vst [vmem:[#allocation4 + $0x780] sm:$0xff] %v1284
    %1797 = vst [vmem:[#allocation4 + $0x788] sm:$0xff] %v1285
    %1798 = vst [vmem:[#allocation4 + $0x790] sm:$0xff] %v1286
    %1799 = vst [vmem:[#allocation4 + $0x798] sm:$0xff] %v1287
    %1800 = vst [vmem:[#allocation4 + $0x7a0] sm:$0xff] %v1288
    %1801 = vst [vmem:[#allocation4 + $0x7a8] sm:$0xff] %v1289
    %1802 = vst [vmem:[#allocation4 + $0x7b0] sm:$0xff] %v1290
    %1803 = vst [vmem:[#allocation4 + $0x7b8] sm:$0xff] %v1291
    %1804 = vst [vmem:[#allocation4 + $0x7c0] sm:$0xff] %v1292
    %1805 = vst [vmem:[#allocation4 + $0x7c8] sm:$0xff] %v1293
    %1806 = vst [vmem:[#allocation4 + $0x7d0] sm:$0xff] %v1294
    %1807 = vst [vmem:[#allocation4 + $0x7d8] sm:$0xff] %v1295
    %1808 = vst [vmem:[#allocation4 + $0x7e0] sm:$0xff] %v1296
    %1809 = vst [vmem:[#allocation4 + $0x7e8] sm:$0xff] %v1297
    %1810 = vst [vmem:[#allocation4 + $0x7f0] sm:$0xff] %v1298
    %1811 = vst [vmem:[#allocation4 + $0x7f8] sm:$0xff] %v1299
    %1812 = vst [vmem:[#allocation4 + $0x800] sm:$0xff] %v1300
    %1813 = vst [vmem:[#allocation4 + $0x808] sm:$0xff] %v1301
    %1814 = vst [vmem:[#allocation4 + $0x810] sm:$0xff] %v1302
    %1815 = vst [vmem:[#allocation4 + $0x818] sm:$0xff] %v1303
    %1816 = vst [vmem:[#allocation4 + $0x820] sm:$0xff] %v1304
    %1817 = vst [vmem:[#allocation4 + $0x828] sm:$0xff] %v1305
    %1818 = vst [vmem:[#allocation4 + $0x830] sm:$0xff] %v1306
    %1819 = vst [vmem:[#allocation4 + $0x838] sm:$0xff] %v1307
    %1820 = vst [vmem:[#allocation4 + $0x840] sm:$0xff] %v1308
    %1821 = vst [vmem:[#allocation4 + $0x848] sm:$0xff] %v1309
    %1822 = vst [vmem:[#allocation4 + $0x850] sm:$0xff] %v1310
    %1823 = vst [vmem:[#allocation4 + $0x858] sm:$0xff] %v1311
    %1824 = vst [vmem:[#allocation4 + $0x860] sm:$0xff] %v1312
    %1825 = vst [vmem:[#allocation4 + $0x868] sm:$0xff] %v1313
    %1826 = vst [vmem:[#allocation4 + $0x870] sm:$0xff] %v1314
    %1827 = vst [vmem:[#allocation4 + $0x878] sm:$0xff] %v1315
    %1828 = vst [vmem:[#allocation4 + $0x880] sm:$0xff] %v1316
    %1829 = vst [vmem:[#allocation4 + $0x888] sm:$0xff] %v1317
    %1830 = vst [vmem:[#allocation4 + $0x890] sm:$0xff] %v1318
    %1831 = vst [vmem:[#allocation4 + $0x898] sm:$0xff] %v1319
    %1832 = vst [vmem:[#allocation4 + $0x8a0] sm:$0xff] %v1320
    %1833 = vst [vmem:[#allocation4 + $0x8a8] sm:$0xff] %v1321
    %1834 = vst [vmem:[#allocation4 + $0x8b0] sm:$0xff] %v1322
    %1835 = vst [vmem:[#allocation4 + $0x8b8] sm:$0xff] %v1323
    %1836 = vst [vmem:[#allocation4 + $0x8c0] sm:$0xff] %v1324
    %1837 = vst [vmem:[#allocation4 + $0x8c8] sm:$0xff] %v1325
    %1838 = vst [vmem:[#allocation4 + $0x8d0] sm:$0xff] %v1326
    %1839 = vst [vmem:[#allocation4 + $0x8d8] sm:$0xff] %v1327
    %1840 = vst [vmem:[#allocation4 + $0x8e0] sm:$0xff] %v1328
    %1841 = vst [vmem:[#allocation4 + $0x8e8] sm:$0xff] %v1329
    %1842 = vst [vmem:[#allocation4 + $0x8f0] sm:$0xff] %v1330
    %1843 = vst [vmem:[#allocation4 + $0x8f8] sm:$0xff] %v1331
    %1844 = vst [vmem:[#allocation4 + $0x900] sm:$0xff] %v1332
    %1845 = vst [vmem:[#allocation4 + $0x908] sm:$0xff] %v1333
    %1846 = vst [vmem:[#allocation4 + $0x910] sm:$0xff] %v1334
    %1847 = vst [vmem:[#allocation4 + $0x918] sm:$0xff] %v1335
    %1848 = vst [vmem:[#allocation4 + $0x920] sm:$0xff] %v1336
    %1849 = vst [vmem:[#allocation4 + $0x928] sm:$0xff] %v1337
    %1850 = vst [vmem:[#allocation4 + $0x930] sm:$0xff] %v1338
    %1851 = vst [vmem:[#allocation4 + $0x938] sm:$0xff] %v1339
    %1852 = vst [vmem:[#allocation4 + $0x940] sm:$0xff] %v1340
    %1853 = vst [vmem:[#allocation4 + $0x948] sm:$0xff] %v1341
    %1854 = vst [vmem:[#allocation4 + $0x950] sm:$0xff] %v1342
    %1855 = vst [vmem:[#allocation4 + $0x958] sm:$0xff] %v1343
    %1856 = vst [vmem:[#allocation4 + $0x960] sm:$0xff] %v1344
    %1857 = vst [vmem:[#allocation4 + $0x968] sm:$0xff] %v1345
    %1858 = vst [vmem:[#allocation4 + $0x970] sm:$0xff] %v1346
    %1859 = vst [vmem:[#allocation4 + $0x978] sm:$0xff] %v1347
    %1860 = vst [vmem:[#allocation4 + $0x980] sm:$0xff] %v1348
    %1861 = vst [vmem:[#allocation4 + $0x988] sm:$0xff] %v1349
    %1862 = vst [vmem:[#allocation4 + $0x990] sm:$0xff] %v1350
    %1863 = vst [vmem:[#allocation4 + $0x998] sm:$0xff] %v1351
    %1864 = vst [vmem:[#allocation4 + $0x9a0] sm:$0xff] %v1352
    %1865 = vst [vmem:[#allocation4 + $0x9a8] sm:$0xff] %v1353
    %1866 = vst [vmem:[#allocation4 + $0x9b0] sm:$0xff] %v1354
    %1867 = vst [vmem:[#allocation4 + $0x9b8] sm:$0xff] %v1355
    %1868 = vst [vmem:[#allocation4 + $0x9c0] sm:$0xff] %v1356
    %1869 = vst [vmem:[#allocation4 + $0x9c8] sm:$0xff] %v1357
    %1870 = vst [vmem:[#allocation4 + $0x9d0] sm:$0xff] %v1358
    %1871 = vst [vmem:[#allocation4 + $0x9d8] sm:$0xff] %v1359
    %1872 = vst [vmem:[#allocation4 + $0x9e0] sm:$0xff] %v1360
    %1873 = vst [vmem:[#allocation4 + $0x9e8] sm:$0xff] %v1361
    %1874 = vst [vmem:[#allocation4 + $0x9f0] sm:$0xff] %v1362
    %1875 = vst [vmem:[#allocation4 + $0x9f8] sm:$0xff] %v1363
    %1876 = vst [vmem:[#allocation4 + $0xa00] sm:$0xff] %v1364
    %1877 = vst [vmem:[#allocation4 + $0xa08] sm:$0xff] %v1365
    %1878 = vst [vmem:[#allocation4 + $0xa10] sm:$0xff] %v1366
    %1879 = vst [vmem:[#allocation4 + $0xa18] sm:$0xff] %v1367
    %1880 = vst [vmem:[#allocation4 + $0xa20] sm:$0xff] %v1368
    %1881 = vst [vmem:[#allocation4 + $0xa28] sm:$0xff] %v1369
    %1882 = vst [vmem:[#allocation4 + $0xa30] sm:$0xff] %v1370
    %1883 = vst [vmem:[#allocation4 + $0xa38] sm:$0xff] %v1371
    %1884 = vst [vmem:[#allocation4 + $0xa40] sm:$0xff] %v1372
    %1885 = vst [vmem:[#allocation4 + $0xa48] sm:$0xff] %v1373
    %1886 = vst [vmem:[#allocation4 + $0xa50] sm:$0xff] %v1374
    %1887 = vst [vmem:[#allocation4 + $0xa58] sm:$0xff] %v1375
    %1888 = vst [vmem:[#allocation4 + $0xa60] sm:$0xff] %v1376
    %1889 = vst [vmem:[#allocation4 + $0xa68] sm:$0xff] %v1377
    %1890 = vst [vmem:[#allocation4 + $0xa70] sm:$0xff] %v1378
    %1891 = vst [vmem:[#allocation4 + $0xa78] sm:$0xff] %v1379
    %1892 = vst [vmem:[#allocation4 + $0xa80] sm:$0xff] %v1380
    %1893 = vst [vmem:[#allocation4 + $0xa88] sm:$0xff] %v1381
    %1894 = vst [vmem:[#allocation4 + $0xa90] sm:$0xff] %v1382
    %1895 = vst [vmem:[#allocation4 + $0xa98] sm:$0xff] %v1383
    %1896 = vst [vmem:[#allocation4 + $0xaa0] sm:$0xff] %v1384
    %1897 = vst [vmem:[#allocation4 + $0xaa8] sm:$0xff] %v1385
    %1898 = vst [vmem:[#allocation4 + $0xab0] sm:$0xff] %v1386
    %1899 = vst [vmem:[#allocation4 + $0xab8] sm:$0xff] %v1387
    %1900 = vst [vmem:[#allocation4 + $0xac0] sm:$0xff] %v1388
    %1901 = vst [vmem:[#allocation4 + $0xac8] sm:$0xff] %v1389
    %1902 = vst [vmem:[#allocation4 + $0xad0] sm:$0xff] %v1390
    %1903 = vst [vmem:[#allocation4 + $0xad8] sm:$0xff] %v1391
    %1904 = vst [vmem:[#allocation4 + $0xae0] sm:$0xff] %v1392
    %1905 = vst [vmem:[#allocation4 + $0xae8] sm:$0xff] %v1393
    %1906 = vst [vmem:[#allocation4 + $0xaf0] sm:$0xff] %v1394
    %1907 = vst [vmem:[#allocation4 + $0xaf8] sm:$0xff] %v1395
    %1908 = vst [vmem:[#allocation4 + $0xb00] sm:$0xff] %v1396
    %1909 = vst [vmem:[#allocation4 + $0xb08] sm:$0xff] %v1397
    %1910 = vst [vmem:[#allocation4 + $0xb10] sm:$0xff] %v1398
    %1911 = vst [vmem:[#allocation4 + $0xb18] sm:$0xff] %v1399
    %1912 = vst [vmem:[#allocation4 + $0xb20] sm:$0xff] %v1400
    %1913 = vst [vmem:[#allocation4 + $0xb28] sm:$0xff] %v1401
    %1914 = vst [vmem:[#allocation4 + $0xb30] sm:$0xff] %v1402
    %1915 = vst [vmem:[#allocation4 + $0xb38] sm:$0xff] %v1403
    %1916 = vst [vmem:[#allocation4 + $0xb40] sm:$0xff] %v1404
    %1917 = vst [vmem:[#allocation4 + $0xb48] sm:$0xff] %v1405
    %1918 = vst [vmem:[#allocation4 + $0xb50] sm:$0xff] %v1406
    %1919 = vst [vmem:[#allocation4 + $0xb58] sm:$0xff] %v1407
    %1920 = vst [vmem:[#allocation4 + $0xb60] sm:$0xff] %v1408
    %1921 = vst [vmem:[#allocation4 + $0xb68] sm:$0xff] %v1409
    %1922 = vst [vmem:[#allocation4 + $0xb70] sm:$0xff] %v1410
    %1923 = vst [vmem:[#allocation4 + $0xb78] sm:$0xff] %v1411
    %1924 = vst [vmem:[#allocation4 + $0xb80] sm:$0xff] %v1412
    %1925 = vst [vmem:[#allocation4 + $0xb88] sm:$0xff] %v1413
    %1926 = vst [vmem:[#allocation4 + $0xb90] sm:$0xff] %v1414
    %1927 = vst [vmem:[#allocation4 + $0xb98] sm:$0xff] %v1415
    %1928 = vst [vmem:[#allocation4 + $0xba0] sm:$0xff] %v1416
    %1929 = vst [vmem:[#allocation4 + $0xba8] sm:$0xff] %v1417
    %1930 = vst [vmem:[#allocation4 + $0xbb0] sm:$0xff] %v1418
    %1931 = vst [vmem:[#allocation4 + $0xbb8] sm:$0xff] %v1419
    %1932 = vst [vmem:[#allocation4 + $0xbc0] sm:$0xff] %v1420
    %1933 = vst [vmem:[#allocation4 + $0xbc8] sm:$0xff] %v1421
    %1934 = vst [vmem:[#allocation4 + $0xbd0] sm:$0xff] %v1422
    %1935 = vst [vmem:[#allocation4 + $0xbd8] sm:$0xff] %v1423
    %1936 = vst [vmem:[#allocation4 + $0xbe0] sm:$0xff] %v1424
    %1937 = vst [vmem:[#allocation4 + $0xbe8] sm:$0xff] %v1425
    %1938 = vst [vmem:[#allocation4 + $0xbf0] sm:$0xff] %v1426
    %1939 = vst [vmem:[#allocation4 + $0xbf8] sm:$0xff] %v1427
    %1940 = vst [vmem:[#allocation4 + $0xc00] sm:$0xff] %v1428
    %1941 = vst [vmem:[#allocation4 + $0xc08] sm:$0xff] %v1429
    %1942 = vst [vmem:[#allocation4 + $0xc10] sm:$0xff] %v1430
    %1943 = vst [vmem:[#allocation4 + $0xc18] sm:$0xff] %v1431
    %1944 = vst [vmem:[#allocation4 + $0xc20] sm:$0xff] %v1432
    %1945 = vst [vmem:[#allocation4 + $0xc28] sm:$0xff] %v1433
    %1946 = vst [vmem:[#allocation4 + $0xc30] sm:$0xff] %v1434
    %1947 = vst [vmem:[#allocation4 + $0xc38] sm:$0xff] %v1435
    %1948 = vst [vmem:[#allocation4 + $0xc40] sm:$0xff] %v1436
    %1949 = vst [vmem:[#allocation4 + $0xc48] sm:$0xff] %v1437
    %1950 = vst [vmem:[#allocation4 + $0xc50] sm:$0xff] %v1438
    %1951 = vst [vmem:[#allocation4 + $0xc58] sm:$0xff] %v1439
    %1952 = vst [vmem:[#allocation4 + $0xc60] sm:$0xff] %v1440
    %1953 = vst [vmem:[#allocation4 + $0xc68] sm:$0xff] %v1441
    %1954 = vst [vmem:[#allocation4 + $0xc70] sm:$0xff] %v1442
    %1955 = vst [vmem:[#allocation4 + $0xc78] sm:$0xff] %v1443
    %1956 = vst [vmem:[#allocation4 + $0xc80] sm:$0xff] %v1444
    %1957 = vst [vmem:[#allocation4 + $0xc88] sm:$0xff] %v1445
    %1958 = vst [vmem:[#allocation4 + $0xc90] sm:$0xff] %v1446
    %1959 = vst [vmem:[#allocation4 + $0xc98] sm:$0xff] %v1447
    %1960 = vst [vmem:[#allocation4 + $0xca0] sm:$0xff] %v1448
    %1961 = vst [vmem:[#allocation4 + $0xca8] sm:$0xff] %v1449
    %1962 = vst [vmem:[#allocation4 + $0xcb0] sm:$0xff] %v1450
    %1963 = vst [vmem:[#allocation4 + $0xcb8] sm:$0xff] %v1451
    %1964 = vst [vmem:[#allocation4 + $0xcc0] sm:$0xff] %v1452
    %1965 = vst [vmem:[#allocation4 + $0xcc8] sm:$0xff] %v1453
    %1966 = vst [vmem:[#allocation4 + $0xcd0] sm:$0xff] %v1454
    %1967 = vst [vmem:[#allocation4 + $0xcd8] sm:$0xff] %v1455
    %1968 = vst [vmem:[#allocation4 + $0xce0] sm:$0xff] %v1456
    %1969 = vst [vmem:[#allocation4 + $0xce8] sm:$0xff] %v1457
    %1970 = vst [vmem:[#allocation4 + $0xcf0] sm:$0xff] %v1458
    %1971 = vst [vmem:[#allocation4 + $0xcf8] sm:$0xff] %v1459
    %1972 = vst [vmem:[#allocation4 + $0xd00] sm:$0xff] %v1460
    %1973 = vst [vmem:[#allocation4 + $0xd08] sm:$0xff] %v1461
    %1974 = vst [vmem:[#allocation4 + $0xd10] sm:$0xff] %v1462
    %1975 = vst [vmem:[#allocation4 + $0xd18] sm:$0xff] %v1463
    %1976 = vst [vmem:[#allocation4 + $0xd20] sm:$0xff] %v1464
    %1977 = vst [vmem:[#allocation4 + $0xd28] sm:$0xff] %v1465
    %1978 = vst [vmem:[#allocation4 + $0xd30] sm:$0xff] %v1466
    %1979 = vst [vmem:[#allocation4 + $0xd38] sm:$0xff] %v1467
    %1980 = vst [vmem:[#allocation4 + $0xd40] sm:$0xff] %v1468
    %1981 = vst [vmem:[#allocation4 + $0xd48] sm:$0xff] %v1469
    %1982 = vst [vmem:[#allocation4 + $0xd50] sm:$0xff] %v1470
    %1983 = vst [vmem:[#allocation4 + $0xd58] sm:$0xff] %v1471
    %1984 = vst [vmem:[#allocation4 + $0xd60] sm:$0xff] %v1472
    %1985 = vst [vmem:[#allocation4 + $0xd68] sm:$0xff] %v1473
    %1986 = vst [vmem:[#allocation4 + $0xd70] sm:$0xff] %v1474
    %1987 = vst [vmem:[#allocation4 + $0xd78] sm:$0xff] %v1475
    %1988 = vst [vmem:[#allocation4 + $0xd80] sm:$0xff] %v1476
    %1989 = vst [vmem:[#allocation4 + $0xd88] sm:$0xff] %v1477
    %1990 = vst [vmem:[#allocation4 + $0xd90] sm:$0xff] %v1478
    %1991 = vst [vmem:[#allocation4 + $0xd98] sm:$0xff] %v1479
    %1992 = vst [vmem:[#allocation4 + $0xda0] sm:$0xff] %v1480
    %1993 = vst [vmem:[#allocation4 + $0xda8] sm:$0xff] %v1481
    %1994 = vst [vmem:[#allocation4 + $0xdb0] sm:$0xff] %v1482
    %1995 = vst [vmem:[#allocation4 + $0xdb8] sm:$0xff] %v1483
    %1996 = vst [vmem:[#allocation4 + $0xdc0] sm:$0xff] %v1484
    %1997 = vst [vmem:[#allocation4 + $0xdc8] sm:$0xff] %v1485
    %1998 = vst [vmem:[#allocation4 + $0xdd0] sm:$0xff] %v1486
    %1999 = vst [vmem:[#allocation4 + $0xdd8] sm:$0xff] %v1487
    %2000 = vst [vmem:[#allocation4 + $0xde0] sm:$0xff] %v1488
    %2001 = vst [vmem:[#allocation4 + $0xde8] sm:$0xff] %v1489
    %2002 = vst [vmem:[#allocation4 + $0xdf0] sm:$0xff] %v1490
    %2003 = vst [vmem:[#allocation4 + $0xdf8] sm:$0xff] %v1491
    %2004 = vst [vmem:[#allocation4 + $0xe00] sm:$0xff] %v1492
    %2005 = vst [vmem:[#allocation4 + $0xe08] sm:$0xff] %v1493
    %2006 = vst [vmem:[#allocation4 + $0xe10] sm:$0xff] %v1494
    %2007 = vst [vmem:[#allocation4 + $0xe18] sm:$0xff] %v1495
    %2008 = vst [vmem:[#allocation4 + $0xe20] sm:$0xff] %v1496
    %2009 = vst [vmem:[#allocation4 + $0xe28] sm:$0xff] %v1497
    %2010 = vst [vmem:[#allocation4 + $0xe30] sm:$0xff] %v1498
    %2011 = vst [vmem:[#allocation4 + $0xe38] sm:$0xff] %v1499
    %2012 = vst [vmem:[#allocation4 + $0xe40] sm:$0xff] %v1500
    %2013 = vst [vmem:[#allocation4 + $0xe48] sm:$0xff] %v1501
    %2014 = vst [vmem:[#allocation4 + $0xe50] sm:$0xff] %v1502
    %2015 = vst [vmem:[#allocation4 + $0xe58] sm:$0xff] %v1503
    %2016 = vst [vmem:[#allocation4 + $0xe60] sm:$0xff] %v1504
    %2017 = vst [vmem:[#allocation4 + $0xe68] sm:$0xff] %v1505
    %2018 = vst [vmem:[#allocation4 + $0xe70] sm:$0xff] %v1506
    %2019 = vst [vmem:[#allocation4 + $0xe78] sm:$0xff] %v1507
    %2020 = vst [vmem:[#allocation4 + $0xe80] sm:$0xff] %v1508
    %2021 = vst [vmem:[#allocation4 + $0xe88] sm:$0xff] %v1509
    %2022 = vst [vmem:[#allocation4 + $0xe90] sm:$0xff] %v1510
    %2023 = vst [vmem:[#allocation4 + $0xe98] sm:$0xff] %v1511
    %2024 = vst [vmem:[#allocation4 + $0xea0] sm:$0xff] %v1512
    %2025 = vst [vmem:[#allocation4 + $0xea8] sm:$0xff] %v1513
    %2026 = vst [vmem:[#allocation4 + $0xeb0] sm:$0xff] %v1514
    %2027 = vst [vmem:[#allocation4 + $0xeb8] sm:$0xff] %v1515
    %2028 = vst [vmem:[#allocation4 + $0xec0] sm:$0xff] %v1516
    %2029 = vst [vmem:[#allocation4 + $0xec8] sm:$0xff] %v1517
    %2030 = vst [vmem:[#allocation4 + $0xed0] sm:$0xff] %v1518
    %2031 = vst [vmem:[#allocation4 + $0xed8] sm:$0xff] %v1519
    %2032 = vst [vmem:[#allocation4 + $0xee0] sm:$0xff] %v1520
    %2033 = vst [vmem:[#allocation4 + $0xee8] sm:$0xff] %v1521
    %2034 = vst [vmem:[#allocation4 + $0xef0] sm:$0xff] %v1522
    %2035 = vst [vmem:[#allocation4 + $0xef8] sm:$0xff] %v1523
    %2036 = vst [vmem:[#allocation4 + $0xf00] sm:$0xff] %v1524
    %2037 = vst [vmem:[#allocation4 + $0xf08] sm:$0xff] %v1525
    %2038 = vst [vmem:[#allocation4 + $0xf10] sm:$0xff] %v1526
    %2039 = vst [vmem:[#allocation4 + $0xf18] sm:$0xff] %v1527
    %2040 = vst [vmem:[#allocation4 + $0xf20] sm:$0xff] %v1528
    %2041 = vst [vmem:[#allocation4 + $0xf28] sm:$0xff] %v1529
    %2042 = vst [vmem:[#allocation4 + $0xf30] sm:$0xff] %v1530
    %2043 = vst [vmem:[#allocation4 + $0xf38] sm:$0xff] %v1531
    %2044 = vst [vmem:[#allocation4 + $0xf40] sm:$0xff] %v1532
    %2045 = vst [vmem:[#allocation4 + $0xf48] sm:$0xff] %v1533
    %2046 = vst [vmem:[#allocation4 + $0xf50] sm:$0xff] %v1534
    %2047 = vst [vmem:[#allocation4 + $0xf58] sm:$0xff] %v1535
    %2048 = vst [vmem:[#allocation4 + $0xf60] sm:$0xff] %v1536
    %2049 = vst [vmem:[#allocation4 + $0xf68] sm:$0xff] %v1537
    %2050 = vst [vmem:[#allocation4 + $0xf70] sm:$0xff] %v1538
    %2051 = vst [vmem:[#allocation4 + $0xf78] sm:$0xff] %v1539
    %2052 = vst [vmem:[#allocation4 + $0xf80] sm:$0xff] %v1540
    %2053 = vst [vmem:[#allocation4 + $0xf88] sm:$0xff] %v1541
    %2054 = vst [vmem:[#allocation4 + $0xf90] sm:$0xff] %v1542
    %2055 = vst [vmem:[#allocation4 + $0xf98] sm:$0xff] %v1543
    %2056 = vst [vmem:[#allocation4 + $0xfa0] sm:$0xff] %v1544
    %2057 = vst [vmem:[#allocation4 + $0xfa8] sm:$0xff] %v1545
    %2058 = vst [vmem:[#allocation4 + $0xfb0] sm:$0xff] %v1546
    %2059 = vst [vmem:[#allocation4 + $0xfb8] sm:$0xff] %v1547
    %2060 = vst [vmem:[#allocation4 + $0xfc0] sm:$0xff] %v1548
    %2061 = vst [vmem:[#allocation4 + $0xfc8] sm:$0xff] %v1549
    %2062 = vst [vmem:[#allocation4 + $0xfd0] sm:$0xff] %v1550
    %2063 = vst [vmem:[#allocation4 + $0xfd8] sm:$0xff] %v1551
    %2064 = vst [vmem:[#allocation4 + $0xfe0] sm:$0xff] %v1552
    %2065 = vst [vmem:[#allocation4 + $0xfe8] sm:$0xff] %v1553
    %2066 = vst [vmem:[#allocation4 + $0xff0] sm:$0xff] %v1554
    %2067 = vst [vmem:[#allocation4 + $0xff8] sm:$0xff] %v1555
    // Predicated region
    $region14: #{linear_1x1.1} parent=1 // pred_check
      _
    $region15: #{linear_1x1.1} parent=1 // pred_check_branch
      %2069 = sbr.rel (0) target = $region17
    $region16: #{linear_1x1.1} parent=1 // pred_region
      // Predicated region
      $region18: #{linear_1x1.1} parent=16 // pred_check
        _
      $region19: #{linear_1x1.1} parent=16 // pred_check_branch
        %2071 = sbr.rel (0) target = $region21
      $region20: #{linear_1x1.1} parent=16 // pred_region
        // Predicated region
        $region22: #{linear_1x1.1} parent=20 // pred_check
          _
        $region23: #{linear_1x1.1} parent=20 // pred_check_branch
          %2073 = sbr.rel (0) target = $region25
        $region24: #{linear_1x1.1} parent=20 // pred_region
          // Predicated region
          $region37: #{linear_1x1.1} parent=24 // pred_check
            _
          $region38: #{linear_1x1.1} parent=24 // pred_check_branch
            %2088 = sbr.rel (0) target = $region40
          $region39: #{linear_1x1.1} parent=24 // pred_region
            loop: start=0, step=1, limit=1
            $region41: #{linear_1x1.1} parent=39 // loop_pre_header
              _
            $region42: #{linear_1x1.1} parent=39 // loop_header
              %s2090 = sphi 0, %s2094
              %p2091 = scmp.ge.s32.totalorder %s2090, 1
              %s2095 = sphi [#allocation4], [#allocation4]
              %s2096 = sphi %s3, %s3
            $region43: #{linear_1x1.1} parent=39 // loop_header_branch
              %2093 = sbr.rel (%p2091) target = $region47
            $region44: #{linear_1x1.1} parent=39 // loop_body
              %v2097 = vld [vmem:[%s2095] sm:$0xff]
              %2098 = vst [vmem:[%s2096] sm:$0xff] %v2097
            $region45: #{linear_1x1.1} parent=39 // loop_footer
              %s2094 = sadd.s32 1, %s2090
            $region46: #{linear_1x1.1} parent=39 // loop_footer_branch
              %2089 = sbr.rel target = $region42
            $region47: #{linear_1x1.1} parent=39 // loop_exit
              _
          $region40: #{linear_1x1.1} parent=24 // pred_fallthru
            _
          // Predicated region
          $region48: #{linear_1x1.1} parent=24 // pred_check
            _
          $region49: #{linear_1x1.1} parent=24 // pred_check_branch
            %2100 = sbr.rel target = $region51
          $region50: #{linear_1x1.1} parent=24 // pred_region
            _
          $region51: #{linear_1x1.1} parent=24 // pred_fallthru
            _
        $region25: #{linear_1x1.1} parent=20 // pred_fallthru
          _
        // Predicated region
        $region26: #{linear_1x1.1} parent=20 // pred_check
          _
        $region27: #{linear_1x1.1} parent=20 // pred_check_branch
          %2075 = sbr.rel target = $region29
        $region28: #{linear_1x1.1} parent=20 // pred_region
          loop: start=0, step=1, limit=1
          $region30: #{linear_1x1.1} parent=28 // loop_pre_header
            _
          $region31: #{linear_1x1.1} parent=28 // loop_header
            %s2078 = sphi 0, %s2082
            %p2079 = scmp.ge.s32.totalorder %s2078, 1
            %s2083 = sphi [#allocation4], [#allocation4]
            %s2084 = sphi %s3, %s3
          $region32: #{linear_1x1.1} parent=28 // loop_header_branch
            %2081 = sbr.rel (%p2079) target = $region36
          $region33: #{linear_1x1.1} parent=28 // loop_body
            %v2085 = vld [vmem:[%s2083] sm:$0xff]
            %2086 = vst [vmem:[%s2084] sm:$0xff] %v2085
          $region34: #{linear_1x1.1} parent=28 // loop_footer
            %s2082 = sadd.s32 1, %s2078
          $region35: #{linear_1x1.1} parent=28 // loop_footer_branch
            %2077 = sbr.rel target = $region31
          $region36: #{linear_1x1.1} parent=28 // loop_exit
            _
        $region29: #{linear_1x1.1} parent=20 // pred_fallthru
          _
      $region21: #{linear_1x1.1} parent=16 // pred_fallthru
        _
      %2101 = vnop
    $region17: #{linear_1x1.1} parent=1 // pred_fallthru
      _
    // Predicated region
    $region52: #{linear_1x1.1} parent=1 // pred_check
      _
    $region53: #{linear_1x1.1} parent=1 // pred_check_branch
      %2103 = sbr.rel (0) target = $region55
    $region54: #{linear_1x1.1} parent=1 // pred_region
      _
    $region55: #{linear_1x1.1} parent=1 // pred_fallthru
      _

</llo_original>
